<compile_context>
chip_gen: v5e
topology: v5e:2x2
jax: 0.10.0
libtpu: 0.0.40
codegen_flags: <defaults>
</compile_context>

<pallas_src>
import jax
import jax.numpy as jnp
from jax import lax
from jax.experimental import pallas as pl
from jax.experimental.pallas import tpu as pltpu

IN_FEATURES = 2048
BN_DIM = 256
BN_EPS = 1e-5


def projector_kernel(x_ref, w_ref, gamma_ref, beta_ref, o_ref):
    """Single invocation: full (N, 2048) @ (2048, BN_DIM) matmul + BN + ReLU.

    x_ref:     (N, 2048) f32
    w_ref:     (2048, BN_DIM) bf16 (upcast in-register)
    gamma_ref: (1, BN_DIM) f32
    beta_ref:  (1, BN_DIM) f32
    o_ref:     (N, BN_DIM) f32
    """
    w = w_ref[...].astype(jnp.float32)
    y = jnp.dot(x_ref[...], w, preferred_element_type=jnp.float32)  # (N, BN_DIM)

    # BatchNorm1d (training mode): per-feature batch mean / biased variance.
    # (Linear bias omitted: it is exactly removed by the mean subtraction.)
    mean = jnp.mean(y, axis=0, keepdims=True)                        # (1, BN_DIM)
    var = jnp.mean((y - mean) ** 2, axis=0, keepdims=True)           # (1, BN_DIM)
    y_hat = (y - mean) * lax.rsqrt(var + BN_EPS)
    out = y_hat * gamma_ref[...] + beta_ref[...]
    o_ref[...] = jnp.maximum(out, 0.0).astype(o_ref.dtype)


def projector_forward(x, w_t, gamma, beta):
    """x: (N, 2048) f32; w_t: (2048, BN_DIM) bf16 or f32; gamma/beta: (1, BN_DIM) f32."""
    n, k_dim = x.shape
    assert k_dim == IN_FEATURES
    bn_dim = w_t.shape[1]

    return pl.pallas_call(
        projector_kernel,
        out_shape=jax.ShapeDtypeStruct((n, bn_dim), jnp.float32),
        grid=(1,),
        in_specs=[
            pl.BlockSpec((n, k_dim), lambda i: (0, 0)),       # x (full)
            pl.BlockSpec((k_dim, bn_dim), lambda i: (0, 0)),  # weight (full, bf16)
            pl.BlockSpec((1, bn_dim), lambda i: (0, 0)),      # bn gamma
            pl.BlockSpec((1, bn_dim), lambda i: (0, 0)),      # bn beta
        ],
        out_specs=pl.BlockSpec((n, bn_dim), lambda i: (0, 0)),
        compiler_params=pltpu.CompilerParams(
            dimension_semantics=("arbitrary",)
        ),
    )(x, w_t, gamma, beta)


def reference_forward(x, w_t, b, gamma, beta):
    """Full PyTorch-equivalent forward (incl. Linear bias) in plain JAX."""
    y = x @ w_t.astype(jnp.float32) + b
    mean = jnp.mean(y, axis=0, keepdims=True)
    var = jnp.mean((y - mean) ** 2, axis=0, keepdims=True)
    y_hat = (y - mean) * lax.rsqrt(var + BN_EPS)
    return jnp.maximum(y_hat * gamma + beta, 0.0)


if __name__ == "__main__":
    key = jax.random.PRNGKey(0)
    k_x, k_w = jax.random.split(key)

    N = 8  # small batch (BatchNorm training mode needs N > 1)

    # Deterministic parameter init, mirroring the PyTorch __init__:
    #   projector_0.weight ~ N(0, 0.005), bias = 0.1
    #   BatchNorm1d: gamma = 1, beta = 0
    w = jax.random.normal(k_w, (BN_DIM, IN_FEATURES), jnp.float32) * 0.005
    w_t = jnp.transpose(w).astype(jnp.bfloat16)              # (2048, BN_DIM), bf16 storage
    b = jnp.full((1, BN_DIM), 0.1, jnp.float32)              # used only by the reference
    gamma = jnp.ones((1, BN_DIM), jnp.float32)
    beta = jnp.zeros((1, BN_DIM), jnp.float32)

    x = jax.random.normal(k_x, (N, IN_FEATURES), jnp.float32)

    out = projector_forward(x, w_t, gamma, beta)
    out = jax.block_until_ready(out)

    ref = reference_forward(x, w_t, b, gamma, beta)
    assert out.shape == (N, BN_DIM)
    assert jnp.allclose(out, ref, atol=1e-4, rtol=1e-4), "mismatch vs reference"

    print("KERNEL_OK")
</pallas_src>

<mosaic_0001>
module attributes {stable_mosaic.version = 11 : i64} {
  func.func @projector_kernel(%arg0: i32, %arg1: memref<8x2048xf32, #tpu.memory_space<vmem>>, %arg2: memref<2048x256xbf16, #tpu.memory_space<vmem>>, %arg3: memref<1x256xf32, #tpu.memory_space<vmem>>, %arg4: memref<1x256xf32, #tpu.memory_space<vmem>>, %arg5: memref<8x256xf32, #tpu.memory_space<vmem>>) attributes {dimension_semantics = [#tpu.dimension_semantics<arbitrary>], iteration_bounds = array<i64: 1>, scalar_prefetch = 0 : i64, scratch_operands = 0 : i64, tpu.core_type = #tpu.core_type<tc>, window_params = [{pipeline_mode = #tpu.pipeline_mode<synchronous>, transform_indices = @transform_0, window_bounds = array<i64: 8, 2048>}, {pipeline_mode = #tpu.pipeline_mode<synchronous>, transform_indices = @transform_1, window_bounds = array<i64: 2048, 256>}, {pipeline_mode = #tpu.pipeline_mode<synchronous>, transform_indices = @transform_2, window_bounds = array<i64: 1, 256>}, {pipeline_mode = #tpu.pipeline_mode<synchronous>, transform_indices = @transform_3, window_bounds = array<i64: 1, 256>}, {pipeline_mode = #tpu.pipeline_mode<synchronous>, transform_indices = @transform_4, window_bounds = array<i64: 8, 256>}]} {
    %c0 = arith.constant 0 : index
    %c0_0 = arith.constant 0 : index
    %0 = vector.load %arg2[%c0, %c0_0] : memref<2048x256xbf16, #tpu.memory_space<vmem>>, vector<2048x256xbf16>
    %1 = arith.extf %0 : vector<2048x256xbf16> to vector<2048x256xf32>
    %c0_1 = arith.constant 0 : index
    %c0_2 = arith.constant 0 : index
    %2 = vector.load %arg1[%c0_1, %c0_2] : memref<8x2048xf32, #tpu.memory_space<vmem>>, vector<8x2048xf32>
    %cst = arith.constant dense<0.000000e+00> : vector<8x256xf32>
    %3 = tpu.matmul %2, %1, %cst {dimension_numbers = #tpu.dot_dimension_numbers<[1], [0], [0], [1], [0, 0, 1, 1], [], []>} : vector<8x2048xf32>, vector<2048x256xf32>, vector<8x256xf32> -> vector<8x256xf32>
    %cst_3 = arith.constant dense<0.000000e+00> : vector<256xf32>
    %4 = vector.multi_reduction <add>, %3, %cst_3 [0] : vector<8x256xf32> to vector<256xf32>
    %5 = vector.shape_cast %4 : vector<256xf32> to vector<1x256xf32>
    %cst_4 = arith.constant 8.000000e+00 : f32
    %6 = vector.broadcast %cst_4 : f32 to vector<1x256xf32>
    %7 = arith.divf %5, %6 : vector<1x256xf32>
    %8 = vector.broadcast %7 : vector<1x256xf32> to vector<8x256xf32>
    %9 = arith.subf %3, %8 : vector<8x256xf32>
    %10 = arith.mulf %9, %9 : vector<8x256xf32>
    %cst_5 = arith.constant dense<0.000000e+00> : vector<256xf32>
    %11 = vector.multi_reduction <add>, %10, %cst_5 [0] : vector<8x256xf32> to vector<256xf32>
    %12 = vector.shape_cast %11 : vector<256xf32> to vector<1x256xf32>
    %cst_6 = arith.constant 8.000000e+00 : f32
    %13 = vector.broadcast %cst_6 : f32 to vector<1x256xf32>
    %14 = arith.divf %12, %13 : vector<1x256xf32>
    %15 = vector.broadcast %7 : vector<1x256xf32> to vector<8x256xf32>
    %16 = arith.subf %3, %15 : vector<8x256xf32>
    %cst_7 = arith.constant 9.99999974E-6 : f32
    %17 = vector.broadcast %cst_7 : f32 to vector<1x256xf32>
    %18 = arith.addf %14, %17 : vector<1x256xf32>
    %19 = math.rsqrt %18 : vector<1x256xf32>
    %20 = vector.broadcast %19 : vector<1x256xf32> to vector<8x256xf32>
    %21 = arith.mulf %16, %20 : vector<8x256xf32>
    %c0_8 = arith.constant 0 : index
    %c0_9 = arith.constant 0 : index
    %22 = vector.load %arg3[%c0_8, %c0_9] : memref<1x256xf32, #tpu.memory_space<vmem>>, vector<1x256xf32>
    %23 = vector.broadcast %22 : vector<1x256xf32> to vector<8x256xf32>
    %24 = arith.mulf %21, %23 : vector<8x256xf32>
    %c0_10 = arith.constant 0 : index
    %c0_11 = arith.constant 0 : index
    %25 = vector.load %arg4[%c0_10, %c0_11] : memref<1x256xf32, #tpu.memory_space<vmem>>, vector<1x256xf32>
    %26 = vector.broadcast %25 : vector<1x256xf32> to vector<8x256xf32>
    %27 = arith.addf %24, %26 : vector<8x256xf32>
    %cst_12 = arith.constant 0.000000e+00 : f32
    %28 = vector.broadcast %cst_12 : f32 to vector<8x256xf32>
    %29 = arith.maximumf %27, %28 : vector<8x256xf32>
    %c0_13 = arith.constant 0 : index
    %c0_14 = arith.constant 0 : index
    %30 = vector.load %arg5[%c0_13, %c0_14] : memref<8x256xf32, #tpu.memory_space<vmem>>, vector<8x256xf32>
    tpu.vector_store %arg5[%c0_13, %c0_14], %29 {strides = array<i32>} : memref<8x256xf32, #tpu.memory_space<vmem>>, vector<8x256xf32>,
    return
  }
  func.func @transform_0(%arg0: i32) -> (i32, i32) {
    %c0_i32 = arith.constant 0 : i32
    %c0_i32_0 = arith.constant 0 : i32
    %c0_i32_1 = arith.constant 0 : i32
    return %c0_i32, %c0_i32_0 : i32, i32
  }
  func.func @transform_1(%arg0: i32) -> (i32, i32) {
    %c0_i32 = arith.constant 0 : i32
    %c0_i32_0 = arith.constant 0 : i32
    %c0_i32_1 = arith.constant 0 : i32
    return %c0_i32, %c0_i32_0 : i32, i32
  }
  func.func @transform_2(%arg0: i32) -> (i32, i32) {
    %c0_i32 = arith.constant 0 : i32
    %c0_i32_0 = arith.constant 0 : i32
    %c0_i32_1 = arith.constant 0 : i32
    return %c0_i32, %c0_i32_0 : i32, i32
  }
  func.func @transform_3(%arg0: i32) -> (i32, i32) {
    %c0_i32 = arith.constant 0 : i32
    %c0_i32_0 = arith.constant 0 : i32
    %c0_i32_1 = arith.constant 0 : i32
    return %c0_i32, %c0_i32_0 : i32, i32
  }
  func.func @transform_4(%arg0: i32) -> (i32, i32) {
    %c0_i32 = arith.constant 0 : i32
    %c0_i32_0 = arith.constant 0 : i32
    %c0_i32_1 = arith.constant 0 : i32
    return %c0_i32, %c0_i32_0 : i32, i32
  }
}

</mosaic_0001>

<llo_original>
// kernel: tpu_custom_call.1
$region0: #{tpu_custom_call.1}
  #allocation0 [shape = 'u32[]', space=smem, size = 0x4, offset = 0x4, fixed_abs, tag = 'smem constant byte address 0x4 - core index']
  #allocation1 [shape = 'u32[72,128]{1,0:T(1,128)}', space=vmem, size = 0x9000, scoped, tag = 'internal scratch']
  %s0 = inlined_call_operand.hbm [shape: f32[8,2048], index: 0, kind: input, shape index: {}]
  %s1 = inlined_call_operand.hbm [shape: bf16[2048,256], index: 1, kind: input, shape index: {}]
  %s2 = inlined_call_operand.hbm [shape: f32[1,256], index: 2, kind: input, shape index: {}]
  %s3 = inlined_call_operand.vmem [shape: f32[1,256], index: 3, kind: input, shape index: {}]
  %s4 = inlined_call_operand.hbm [shape: f32[8,256], index: 4, kind: output, shape index: {}]
  %s5 = sld [smem:[#allocation0]]
  $region38: #{tpu_custom_call.1} parent=0
    _
  %s7 = ssub.s32 1, %s5
  %s8 = scalar_select 0, %s7, %s5
  $region1: #{tpu_custom_call.1} parent=0
    #allocation2 [shape = 'u8[65536]{0}', space=vmem, size = 0x10000, scoped, tag = 'input window, operand 0, single buffered']
    #allocation3 [shape = 's32[1]{0}', space=sflag, size = 0x4, scoped, tag = 'scoped memory for tpu_custom_call.1']
    #allocation4 [shape = 's32[1]{0}', space=sflag, size = 0x4, scoped, tag = 'scoped memory for tpu_custom_call.1']
    #allocation5 [shape = 'u8[1048576]{0}', space=vmem, size = 0x100000, scoped, tag = 'input window, operand 1, single buffered']
    #allocation6 [shape = 's32[1]{0}', space=sflag, size = 0x4, scoped, tag = 'scoped memory for tpu_custom_call.1']
    #allocation7 [shape = 'u8[1024]{0}', space=vmem, size = 0x400, scoped, tag = 'input window, operand 2, single buffered']
    #allocation8 [shape = 'u8[8192]{0}', space=vmem, size = 0x2000, scoped, tag = 'output window, operand 0, single buffered']
    %9 = vsyncpa [#allocation3], 0
    %10 = vsyncpa [#allocation6], 0
    %11 = vsyncpa [#allocation4], 0
    // Predicated region
    $region2: #{tpu_custom_call.1} parent=1 // pred_check
      _
    $region3: #{tpu_custom_call.1} parent=1 // pred_check_branch
      %13 = sbr.rel (0) target = $region5
    $region4: #{tpu_custom_call.1} parent=1 // pred_region
      %15 = vsyncadd [#allocation3], 0
      %s17 = sshll.u32 %s0, 4
      %s18 = int_to_ptr.hbm [resolvable:$true] %s17
      %s19 = sshll.u32 [#allocation2], 4
      %s20 = int_to_ptr.vmem [resolvable:$true] %s19
      %22 = dma.hbm_to_vmem [thread:$0]  %s18, 2048, %s20, [#allocation3]
    $region5: #{tpu_custom_call.1} parent=1 // pred_fallthru
      _
    // Predicated region
    $region6: #{tpu_custom_call.1} parent=1 // pred_check
      _
    $region7: #{tpu_custom_call.1} parent=1 // pred_check_branch
      %24 = sbr.rel (0) target = $region9
    $region8: #{tpu_custom_call.1} parent=1 // pred_region
      %26 = vsyncadd [#allocation6], 0
      %s27 = sshll.u32 %s1, 4
      %s28 = int_to_ptr.hbm [resolvable:$true] %s27
      %s29 = sshll.u32 [#allocation5], 4
      %s30 = int_to_ptr.vmem [resolvable:$true] %s29
      %35 = dma.hbm_to_vmem [thread:$0]  %s28, 32768, %s30, [#allocation6], 128, 128, 8
    $region9: #{tpu_custom_call.1} parent=1 // pred_fallthru
      _
    // Predicated region
    $region10: #{tpu_custom_call.1} parent=1 // pred_check
      _
    $region11: #{tpu_custom_call.1} parent=1 // pred_check_branch
      %37 = sbr.rel (0) target = $region13
    $region12: #{tpu_custom_call.1} parent=1 // pred_region
      %39 = vsyncadd [#allocation6], 0
      %s41 = sshll.u32 %s2, 4
      %s42 = int_to_ptr.hbm [resolvable:$true] %s41
      %s43 = sshll.u32 [#allocation7], 4
      %s44 = int_to_ptr.vmem [resolvable:$true] %s43
      %46 = dma.hbm_to_vmem [thread:$0]  %s42, 32, %s44, [#allocation6]
    $region13: #{tpu_custom_call.1} parent=1 // pred_fallthru
      _
    // Predicated region
    $region14: #{tpu_custom_call.1} parent=1 // pred_check
      _
    $region15: #{tpu_custom_call.1} parent=1 // pred_check_branch
      %48 = sbr.rel (0) target = $region17
    $region16: #{tpu_custom_call.1} parent=1 // pred_region
      _
    $region17: #{tpu_custom_call.1} parent=1 // pred_fallthru
      _
    // Predicated region
    $region18: #{tpu_custom_call.1} parent=1 // pred_check
      _
    $region19: #{tpu_custom_call.1} parent=1 // pred_check_branch
      %50 = sbr.rel (0) target = $region21
    $region20: #{tpu_custom_call.1} parent=1 // pred_region
      %52 = dma.done [#allocation3], 2048
    $region21: #{tpu_custom_call.1} parent=1 // pred_fallthru
      _
    // Predicated region
    $region22: #{tpu_custom_call.1} parent=1 // pred_check
      _
    $region23: #{tpu_custom_call.1} parent=1 // pred_check_branch
      %54 = sbr.rel (0) target = $region25
    $region24: #{tpu_custom_call.1} parent=1 // pred_region
      %56 = dma.done [#allocation6], 32768
    $region25: #{tpu_custom_call.1} parent=1 // pred_fallthru
      _
    // Predicated region
    $region26: #{tpu_custom_call.1} parent=1 // pred_check
      _
    $region27: #{tpu_custom_call.1} parent=1 // pred_check_branch
      %58 = sbr.rel (0) target = $region29
    $region28: #{tpu_custom_call.1} parent=1 // pred_region
      %60 = dma.done [#allocation6], 32
    $region29: #{tpu_custom_call.1} parent=1 // pred_fallthru
      _
    %v61 = vld [vmem:[#allocation5] sm:$0xff]
    %v62 = vld [vmem:[#allocation5 + $0x8] sm:$0xff]
    %v63 = vld [vmem:[#allocation5 + $0x10] sm:$0xff]
    %v64 = vld [vmem:[#allocation5 + $0x18] sm:$0xff]
    %v65 = vld [vmem:[#allocation5 + $0x20] sm:$0xff]
    %v66 = vld [vmem:[#allocation5 + $0x28] sm:$0xff]
    %v67 = vld [vmem:[#allocation5 + $0x30] sm:$0xff]
    %v68 = vld [vmem:[#allocation5 + $0x38] sm:$0xff]
    %v69 = vld [vmem:[#allocation5 + $0x40] sm:$0xff]
    %v70 = vld [vmem:[#allocation5 + $0x48] sm:$0xff]
    %v71 = vld [vmem:[#allocation5 + $0x50] sm:$0xff]
    %v72 = vld [vmem:[#allocation5 + $0x58] sm:$0xff]
    %v73 = vld [vmem:[#allocation5 + $0x60] sm:$0xff]
    %v74 = vld [vmem:[#allocation5 + $0x68] sm:$0xff]
    %v75 = vld [vmem:[#allocation5 + $0x70] sm:$0xff]
    %v76 = vld [vmem:[#allocation5 + $0x78] sm:$0xff]
    %v77 = vld [vmem:[#allocation5 + $0x80] sm:$0xff]
    %v78 = vld [vmem:[#allocation5 + $0x88] sm:$0xff]
    %v79 = vld [vmem:[#allocation5 + $0x90] sm:$0xff]
    %v80 = vld [vmem:[#allocation5 + $0x98] sm:$0xff]
    %v81 = vld [vmem:[#allocation5 + $0xa0] sm:$0xff]
    %v82 = vld [vmem:[#allocation5 + $0xa8] sm:$0xff]
    %v83 = vld [vmem:[#allocation5 + $0xb0] sm:$0xff]
    %v84 = vld [vmem:[#allocation5 + $0xb8] sm:$0xff]
    %v85 = vld [vmem:[#allocation5 + $0xc0] sm:$0xff]
    %v86 = vld [vmem:[#allocation5 + $0xc8] sm:$0xff]
    %v87 = vld [vmem:[#allocation5 + $0xd0] sm:$0xff]
    %v88 = vld [vmem:[#allocation5 + $0xd8] sm:$0xff]
    %v89 = vld [vmem:[#allocation5 + $0xe0] sm:$0xff]
    %v90 = vld [vmem:[#allocation5 + $0xe8] sm:$0xff]
    %v91 = vld [vmem:[#allocation5 + $0xf0] sm:$0xff]
    %v92 = vld [vmem:[#allocation5 + $0xf8] sm:$0xff]
    %v93 = vld [vmem:[#allocation5 + $0x100] sm:$0xff]
    %v94 = vld [vmem:[#allocation5 + $0x108] sm:$0xff]
    %v95 = vld [vmem:[#allocation5 + $0x110] sm:$0xff]
    %v96 = vld [vmem:[#allocation5 + $0x118] sm:$0xff]
    %v97 = vld [vmem:[#allocation5 + $0x120] sm:$0xff]
    %v98 = vld [vmem:[#allocation5 + $0x128] sm:$0xff]
    %v99 = vld [vmem:[#allocation5 + $0x130] sm:$0xff]
    %v100 = vld [vmem:[#allocation5 + $0x138] sm:$0xff]
    %v101 = vld [vmem:[#allocation5 + $0x140] sm:$0xff]
    %v102 = vld [vmem:[#allocation5 + $0x148] sm:$0xff]
    %v103 = vld [vmem:[#allocation5 + $0x150] sm:$0xff]
    %v104 = vld [vmem:[#allocation5 + $0x158] sm:$0xff]
    %v105 = vld [vmem:[#allocation5 + $0x160] sm:$0xff]
    %v106 = vld [vmem:[#allocation5 + $0x168] sm:$0xff]
    %v107 = vld [vmem:[#allocation5 + $0x170] sm:$0xff]
    %v108 = vld [vmem:[#allocation5 + $0x178] sm:$0xff]
    %v109 = vld [vmem:[#allocation5 + $0x180] sm:$0xff]
    %v110 = vld [vmem:[#allocation5 + $0x188] sm:$0xff]
    %v111 = vld [vmem:[#allocation5 + $0x190] sm:$0xff]
    %v112 = vld [vmem:[#allocation5 + $0x198] sm:$0xff]
    %v113 = vld [vmem:[#allocation5 + $0x1a0] sm:$0xff]
    %v114 = vld [vmem:[#allocation5 + $0x1a8] sm:$0xff]
    %v115 = vld [vmem:[#allocation5 + $0x1b0] sm:$0xff]
    %v116 = vld [vmem:[#allocation5 + $0x1b8] sm:$0xff]
    %v117 = vld [vmem:[#allocation5 + $0x1c0] sm:$0xff]
    %v118 = vld [vmem:[#allocation5 + $0x1c8] sm:$0xff]
    %v119 = vld [vmem:[#allocation5 + $0x1d0] sm:$0xff]
    %v120 = vld [vmem:[#allocation5 + $0x1d8] sm:$0xff]
    %v121 = vld [vmem:[#allocation5 + $0x1e0] sm:$0xff]
    %v122 = vld [vmem:[#allocation5 + $0x1e8] sm:$0xff]
    %v123 = vld [vmem:[#allocation5 + $0x1f0] sm:$0xff]
    %v124 = vld [vmem:[#allocation5 + $0x1f8] sm:$0xff]
    %v125 = vld [vmem:[#allocation5 + $0x200] sm:$0xff]
    %v126 = vld [vmem:[#allocation5 + $0x208] sm:$0xff]
    %v127 = vld [vmem:[#allocation5 + $0x210] sm:$0xff]
    %v128 = vld [vmem:[#allocation5 + $0x218] sm:$0xff]
    %v129 = vld [vmem:[#allocation5 + $0x220] sm:$0xff]
    %v130 = vld [vmem:[#allocation5 + $0x228] sm:$0xff]
    %v131 = vld [vmem:[#allocation5 + $0x230] sm:$0xff]
    %v132 = vld [vmem:[#allocation5 + $0x238] sm:$0xff]
    %v133 = vld [vmem:[#allocation5 + $0x240] sm:$0xff]
    %v134 = vld [vmem:[#allocation5 + $0x248] sm:$0xff]
    %v135 = vld [vmem:[#allocation5 + $0x250] sm:$0xff]
    %v136 = vld [vmem:[#allocation5 + $0x258] sm:$0xff]
    %v137 = vld [vmem:[#allocation5 + $0x260] sm:$0xff]
    %v138 = vld [vmem:[#allocation5 + $0x268] sm:$0xff]
    %v139 = vld [vmem:[#allocation5 + $0x270] sm:$0xff]
    %v140 = vld [vmem:[#allocation5 + $0x278] sm:$0xff]
    %v141 = vld [vmem:[#allocation5 + $0x280] sm:$0xff]
    %v142 = vld [vmem:[#allocation5 + $0x288] sm:$0xff]
    %v143 = vld [vmem:[#allocation5 + $0x290] sm:$0xff]
    %v144 = vld [vmem:[#allocation5 + $0x298] sm:$0xff]
    %v145 = vld [vmem:[#allocation5 + $0x2a0] sm:$0xff]
    %v146 = vld [vmem:[#allocation5 + $0x2a8] sm:$0xff]
    %v147 = vld [vmem:[#allocation5 + $0x2b0] sm:$0xff]
    %v148 = vld [vmem:[#allocation5 + $0x2b8] sm:$0xff]
    %v149 = vld [vmem:[#allocation5 + $0x2c0] sm:$0xff]
    %v150 = vld [vmem:[#allocation5 + $0x2c8] sm:$0xff]
    %v151 = vld [vmem:[#allocation5 + $0x2d0] sm:$0xff]
    %v152 = vld [vmem:[#allocation5 + $0x2d8] sm:$0xff]
    %v153 = vld [vmem:[#allocation5 + $0x2e0] sm:$0xff]
    %v154 = vld [vmem:[#allocation5 + $0x2e8] sm:$0xff]
    %v155 = vld [vmem:[#allocation5 + $0x2f0] sm:$0xff]
    %v156 = vld [vmem:[#allocation5 + $0x2f8] sm:$0xff]
    %v157 = vld [vmem:[#allocation5 + $0x300] sm:$0xff]
    %v158 = vld [vmem:[#allocation5 + $0x308] sm:$0xff]
    %v159 = vld [vmem:[#allocation5 + $0x310] sm:$0xff]
    %v160 = vld [vmem:[#allocation5 + $0x318] sm:$0xff]
    %v161 = vld [vmem:[#allocation5 + $0x320] sm:$0xff]
    %v162 = vld [vmem:[#allocation5 + $0x328] sm:$0xff]
    %v163 = vld [vmem:[#allocation5 + $0x330] sm:$0xff]
    %v164 = vld [vmem:[#allocation5 + $0x338] sm:$0xff]
    %v165 = vld [vmem:[#allocation5 + $0x340] sm:$0xff]
    %v166 = vld [vmem:[#allocation5 + $0x348] sm:$0xff]
    %v167 = vld [vmem:[#allocation5 + $0x350] sm:$0xff]
    %v168 = vld [vmem:[#allocation5 + $0x358] sm:$0xff]
    %v169 = vld [vmem:[#allocation5 + $0x360] sm:$0xff]
    %v170 = vld [vmem:[#allocation5 + $0x368] sm:$0xff]
    %v171 = vld [vmem:[#allocation5 + $0x370] sm:$0xff]
    %v172 = vld [vmem:[#allocation5 + $0x378] sm:$0xff]
    %v173 = vld [vmem:[#allocation5 + $0x380] sm:$0xff]
    %v174 = vld [vmem:[#allocation5 + $0x388] sm:$0xff]
    %v175 = vld [vmem:[#allocation5 + $0x390] sm:$0xff]
    %v176 = vld [vmem:[#allocation5 + $0x398] sm:$0xff]
    %v177 = vld [vmem:[#allocation5 + $0x3a0] sm:$0xff]
    %v178 = vld [vmem:[#allocation5 + $0x3a8] sm:$0xff]
    %v179 = vld [vmem:[#allocation5 + $0x3b0] sm:$0xff]
    %v180 = vld [vmem:[#allocation5 + $0x3b8] sm:$0xff]
    %v181 = vld [vmem:[#allocation5 + $0x3c0] sm:$0xff]
    %v182 = vld [vmem:[#allocation5 + $0x3c8] sm:$0xff]
    %v183 = vld [vmem:[#allocation5 + $0x3d0] sm:$0xff]
    %v184 = vld [vmem:[#allocation5 + $0x3d8] sm:$0xff]
    %v185 = vld [vmem:[#allocation5 + $0x3e0] sm:$0xff]
    %v186 = vld [vmem:[#allocation5 + $0x3e8] sm:$0xff]
    %v187 = vld [vmem:[#allocation5 + $0x3f0] sm:$0xff]
    %v188 = vld [vmem:[#allocation5 + $0x3f8] sm:$0xff]
    %v189 = vld [vmem:[#allocation5 + $0x400] sm:$0xff]
    %v190 = vld [vmem:[#allocation5 + $0x408] sm:$0xff]
    %v191 = vld [vmem:[#allocation5 + $0x410] sm:$0xff]
    %v192 = vld [vmem:[#allocation5 + $0x418] sm:$0xff]
    %v193 = vld [vmem:[#allocation5 + $0x420] sm:$0xff]
    %v194 = vld [vmem:[#allocation5 + $0x428] sm:$0xff]
    %v195 = vld [vmem:[#allocation5 + $0x430] sm:$0xff]
    %v196 = vld [vmem:[#allocation5 + $0x438] sm:$0xff]
    %v197 = vld [vmem:[#allocation5 + $0x440] sm:$0xff]
    %v198 = vld [vmem:[#allocation5 + $0x448] sm:$0xff]
    %v199 = vld [vmem:[#allocation5 + $0x450] sm:$0xff]
    %v200 = vld [vmem:[#allocation5 + $0x458] sm:$0xff]
    %v201 = vld [vmem:[#allocation5 + $0x460] sm:$0xff]
    %v202 = vld [vmem:[#allocation5 + $0x468] sm:$0xff]
    %v203 = vld [vmem:[#allocation5 + $0x470] sm:$0xff]
    %v204 = vld [vmem:[#allocation5 + $0x478] sm:$0xff]
    %v205 = vld [vmem:[#allocation5 + $0x480] sm:$0xff]
    %v206 = vld [vmem:[#allocation5 + $0x488] sm:$0xff]
    %v207 = vld [vmem:[#allocation5 + $0x490] sm:$0xff]
    %v208 = vld [vmem:[#allocation5 + $0x498] sm:$0xff]
    %v209 = vld [vmem:[#allocation5 + $0x4a0] sm:$0xff]
    %v210 = vld [vmem:[#allocation5 + $0x4a8] sm:$0xff]
    %v211 = vld [vmem:[#allocation5 + $0x4b0] sm:$0xff]
    %v212 = vld [vmem:[#allocation5 + $0x4b8] sm:$0xff]
    %v213 = vld [vmem:[#allocation5 + $0x4c0] sm:$0xff]
    %v214 = vld [vmem:[#allocation5 + $0x4c8] sm:$0xff]
    %v215 = vld [vmem:[#allocation5 + $0x4d0] sm:$0xff]
    %v216 = vld [vmem:[#allocation5 + $0x4d8] sm:$0xff]
    %v217 = vld [vmem:[#allocation5 + $0x4e0] sm:$0xff]
    %v218 = vld [vmem:[#allocation5 + $0x4e8] sm:$0xff]
    %v219 = vld [vmem:[#allocation5 + $0x4f0] sm:$0xff]
    %v220 = vld [vmem:[#allocation5 + $0x4f8] sm:$0xff]
    %v221 = vld [vmem:[#allocation5 + $0x500] sm:$0xff]
    %v222 = vld [vmem:[#allocation5 + $0x508] sm:$0xff]
    %v223 = vld [vmem:[#allocation5 + $0x510] sm:$0xff]
    %v224 = vld [vmem:[#allocation5 + $0x518] sm:$0xff]
    %v225 = vld [vmem:[#allocation5 + $0x520] sm:$0xff]
    %v226 = vld [vmem:[#allocation5 + $0x528] sm:$0xff]
    %v227 = vld [vmem:[#allocation5 + $0x530] sm:$0xff]
    %v228 = vld [vmem:[#allocation5 + $0x538] sm:$0xff]
    %v229 = vld [vmem:[#allocation5 + $0x540] sm:$0xff]
    %v230 = vld [vmem:[#allocation5 + $0x548] sm:$0xff]
    %v231 = vld [vmem:[#allocation5 + $0x550] sm:$0xff]
    %v232 = vld [vmem:[#allocation5 + $0x558] sm:$0xff]
    %v233 = vld [vmem:[#allocation5 + $0x560] sm:$0xff]
    %v234 = vld [vmem:[#allocation5 + $0x568] sm:$0xff]
    %v235 = vld [vmem:[#allocation5 + $0x570] sm:$0xff]
    %v236 = vld [vmem:[#allocation5 + $0x578] sm:$0xff]
    %v237 = vld [vmem:[#allocation5 + $0x580] sm:$0xff]
    %v238 = vld [vmem:[#allocation5 + $0x588] sm:$0xff]
    %v239 = vld [vmem:[#allocation5 + $0x590] sm:$0xff]
    %v240 = vld [vmem:[#allocation5 + $0x598] sm:$0xff]
    %v241 = vld [vmem:[#allocation5 + $0x5a0] sm:$0xff]
    %v242 = vld [vmem:[#allocation5 + $0x5a8] sm:$0xff]
    %v243 = vld [vmem:[#allocation5 + $0x5b0] sm:$0xff]
    %v244 = vld [vmem:[#allocation5 + $0x5b8] sm:$0xff]
    %v245 = vld [vmem:[#allocation5 + $0x5c0] sm:$0xff]
    %v246 = vld [vmem:[#allocation5 + $0x5c8] sm:$0xff]
    %v247 = vld [vmem:[#allocation5 + $0x5d0] sm:$0xff]
    %v248 = vld [vmem:[#allocation5 + $0x5d8] sm:$0xff]
    %v249 = vld [vmem:[#allocation5 + $0x5e0] sm:$0xff]
    %v250 = vld [vmem:[#allocation5 + $0x5e8] sm:$0xff]
    %v251 = vld [vmem:[#allocation5 + $0x5f0] sm:$0xff]
    %v252 = vld [vmem:[#allocation5 + $0x5f8] sm:$0xff]
    %v253 = vld [vmem:[#allocation5 + $0x600] sm:$0xff]
    %v254 = vld [vmem:[#allocation5 + $0x608] sm:$0xff]
    %v255 = vld [vmem:[#allocation5 + $0x610] sm:$0xff]
    %v256 = vld [vmem:[#allocation5 + $0x618] sm:$0xff]
    %v257 = vld [vmem:[#allocation5 + $0x620] sm:$0xff]
    %v258 = vld [vmem:[#allocation5 + $0x628] sm:$0xff]
    %v259 = vld [vmem:[#allocation5 + $0x630] sm:$0xff]
    %v260 = vld [vmem:[#allocation5 + $0x638] sm:$0xff]
    %v261 = vld [vmem:[#allocation5 + $0x640] sm:$0xff]
    %v262 = vld [vmem:[#allocation5 + $0x648] sm:$0xff]
    %v263 = vld [vmem:[#allocation5 + $0x650] sm:$0xff]
    %v264 = vld [vmem:[#allocation5 + $0x658] sm:$0xff]
    %v265 = vld [vmem:[#allocation5 + $0x660] sm:$0xff]
    %v266 = vld [vmem:[#allocation5 + $0x668] sm:$0xff]
    %v267 = vld [vmem:[#allocation5 + $0x670] sm:$0xff]
    %v268 = vld [vmem:[#allocation5 + $0x678] sm:$0xff]
    %v269 = vld [vmem:[#allocation5 + $0x680] sm:$0xff]
    %v270 = vld [vmem:[#allocation5 + $0x688] sm:$0xff]
    %v271 = vld [vmem:[#allocation5 + $0x690] sm:$0xff]
    %v272 = vld [vmem:[#allocation5 + $0x698] sm:$0xff]
    %v273 = vld [vmem:[#allocation5 + $0x6a0] sm:$0xff]
    %v274 = vld [vmem:[#allocation5 + $0x6a8] sm:$0xff]
    %v275 = vld [vmem:[#allocation5 + $0x6b0] sm:$0xff]
    %v276 = vld [vmem:[#allocation5 + $0x6b8] sm:$0xff]
    %v277 = vld [vmem:[#allocation5 + $0x6c0] sm:$0xff]
    %v278 = vld [vmem:[#allocation5 + $0x6c8] sm:$0xff]
    %v279 = vld [vmem:[#allocation5 + $0x6d0] sm:$0xff]
    %v280 = vld [vmem:[#allocation5 + $0x6d8] sm:$0xff]
    %v281 = vld [vmem:[#allocation5 + $0x6e0] sm:$0xff]
    %v282 = vld [vmem:[#allocation5 + $0x6e8] sm:$0xff]
    %v283 = vld [vmem:[#allocation5 + $0x6f0] sm:$0xff]
    %v284 = vld [vmem:[#allocation5 + $0x6f8] sm:$0xff]
    %v285 = vld [vmem:[#allocation5 + $0x700] sm:$0xff]
    %v286 = vld [vmem:[#allocation5 + $0x708] sm:$0xff]
    %v287 = vld [vmem:[#allocation5 + $0x710] sm:$0xff]
    %v288 = vld [vmem:[#allocation5 + $0x718] sm:$0xff]
    %v289 = vld [vmem:[#allocation5 + $0x720] sm:$0xff]
    %v290 = vld [vmem:[#allocation5 + $0x728] sm:$0xff]
    %v291 = vld [vmem:[#allocation5 + $0x730] sm:$0xff]
    %v292 = vld [vmem:[#allocation5 + $0x738] sm:$0xff]
    %v293 = vld [vmem:[#allocation5 + $0x740] sm:$0xff]
    %v294 = vld [vmem:[#allocation5 + $0x748] sm:$0xff]
    %v295 = vld [vmem:[#allocation5 + $0x750] sm:$0xff]
    %v296 = vld [vmem:[#allocation5 + $0x758] sm:$0xff]
    %v297 = vld [vmem:[#allocation5 + $0x760] sm:$0xff]
    %v298 = vld [vmem:[#allocation5 + $0x768] sm:$0xff]
    %v299 = vld [vmem:[#allocation5 + $0x770] sm:$0xff]
    %v300 = vld [vmem:[#allocation5 + $0x778] sm:$0xff]
    %v301 = vld [vmem:[#allocation5 + $0x780] sm:$0xff]
    %v302 = vld [vmem:[#allocation5 + $0x788] sm:$0xff]
    %v303 = vld [vmem:[#allocation5 + $0x790] sm:$0xff]
    %v304 = vld [vmem:[#allocation5 + $0x798] sm:$0xff]
    %v305 = vld [vmem:[#allocation5 + $0x7a0] sm:$0xff]
    %v306 = vld [vmem:[#allocation5 + $0x7a8] sm:$0xff]
    %v307 = vld [vmem:[#allocation5 + $0x7b0] sm:$0xff]
    %v308 = vld [vmem:[#allocation5 + $0x7b8] sm:$0xff]
    %v309 = vld [vmem:[#allocation5 + $0x7c0] sm:$0xff]
    %v310 = vld [vmem:[#allocation5 + $0x7c8] sm:$0xff]
    %v311 = vld [vmem:[#allocation5 + $0x7d0] sm:$0xff]
    %v312 = vld [vmem:[#allocation5 + $0x7d8] sm:$0xff]
    %v313 = vld [vmem:[#allocation5 + $0x7e0] sm:$0xff]
    %v314 = vld [vmem:[#allocation5 + $0x7e8] sm:$0xff]
    %v315 = vld [vmem:[#allocation5 + $0x7f0] sm:$0xff]
    %v316 = vld [vmem:[#allocation5 + $0x7f8] sm:$0xff]
    %v317 = vunpack.c.l.bf16 %v61
    %v318 = vunpack.c.h.bf16 %v61
    %v319 = vunpack.c.l.bf16 %v62
    %v320 = vunpack.c.h.bf16 %v62
    %v321 = vunpack.c.l.bf16 %v63
    %v322 = vunpack.c.h.bf16 %v63
    %v323 = vunpack.c.l.bf16 %v64
    %v324 = vunpack.c.h.bf16 %v64
    %v325 = vunpack.c.l.bf16 %v65
    %v326 = vunpack.c.h.bf16 %v65
    %v327 = vunpack.c.l.bf16 %v66
    %v328 = vunpack.c.h.bf16 %v66
    %v329 = vunpack.c.l.bf16 %v67
    %v330 = vunpack.c.h.bf16 %v67
    %v331 = vunpack.c.l.bf16 %v68
    %v332 = vunpack.c.h.bf16 %v68
    %v333 = vunpack.c.l.bf16 %v69
    %v334 = vunpack.c.h.bf16 %v69
    %v335 = vunpack.c.l.bf16 %v70
    %v336 = vunpack.c.h.bf16 %v70
    %v337 = vunpack.c.l.bf16 %v71
    %v338 = vunpack.c.h.bf16 %v71
    %v339 = vunpack.c.l.bf16 %v72
    %v340 = vunpack.c.h.bf16 %v72
    %v341 = vunpack.c.l.bf16 %v73
    %v342 = vunpack.c.h.bf16 %v73
    %v343 = vunpack.c.l.bf16 %v74
    %v344 = vunpack.c.h.bf16 %v74
    %v345 = vunpack.c.l.bf16 %v75
    %v346 = vunpack.c.h.bf16 %v75
    %v347 = vunpack.c.l.bf16 %v76
    %v348 = vunpack.c.h.bf16 %v76
    %v349 = vunpack.c.l.bf16 %v77
    %v350 = vunpack.c.h.bf16 %v77
    %v351 = vunpack.c.l.bf16 %v78
    %v352 = vunpack.c.h.bf16 %v78
    %v353 = vunpack.c.l.bf16 %v79
    %v354 = vunpack.c.h.bf16 %v79
    %v355 = vunpack.c.l.bf16 %v80
    %v356 = vunpack.c.h.bf16 %v80
    %v357 = vunpack.c.l.bf16 %v81
    %v358 = vunpack.c.h.bf16 %v81
    %v359 = vunpack.c.l.bf16 %v82
    %v360 = vunpack.c.h.bf16 %v82
    %v361 = vunpack.c.l.bf16 %v83
    %v362 = vunpack.c.h.bf16 %v83
    %v363 = vunpack.c.l.bf16 %v84
    %v364 = vunpack.c.h.bf16 %v84
    %v365 = vunpack.c.l.bf16 %v85
    %v366 = vunpack.c.h.bf16 %v85
    %v367 = vunpack.c.l.bf16 %v86
    %v368 = vunpack.c.h.bf16 %v86
    %v369 = vunpack.c.l.bf16 %v87
    %v370 = vunpack.c.h.bf16 %v87
    %v371 = vunpack.c.l.bf16 %v88
    %v372 = vunpack.c.h.bf16 %v88
    %v373 = vunpack.c.l.bf16 %v89
    %v374 = vunpack.c.h.bf16 %v89
    %v375 = vunpack.c.l.bf16 %v90
    %v376 = vunpack.c.h.bf16 %v90
    %v377 = vunpack.c.l.bf16 %v91
    %v378 = vunpack.c.h.bf16 %v91
    %v379 = vunpack.c.l.bf16 %v92
    %v380 = vunpack.c.h.bf16 %v92
    %v381 = vunpack.c.l.bf16 %v93
    %v382 = vunpack.c.h.bf16 %v93
    %v383 = vunpack.c.l.bf16 %v94
    %v384 = vunpack.c.h.bf16 %v94
    %v385 = vunpack.c.l.bf16 %v95
    %v386 = vunpack.c.h.bf16 %v95
    %v387 = vunpack.c.l.bf16 %v96
    %v388 = vunpack.c.h.bf16 %v96
    %v389 = vunpack.c.l.bf16 %v97
    %v390 = vunpack.c.h.bf16 %v97
    %v391 = vunpack.c.l.bf16 %v98
    %v392 = vunpack.c.h.bf16 %v98
    %v393 = vunpack.c.l.bf16 %v99
    %v394 = vunpack.c.h.bf16 %v99
    %v395 = vunpack.c.l.bf16 %v100
    %v396 = vunpack.c.h.bf16 %v100
    %v397 = vunpack.c.l.bf16 %v101
    %v398 = vunpack.c.h.bf16 %v101
    %v399 = vunpack.c.l.bf16 %v102
    %v400 = vunpack.c.h.bf16 %v102
    %v401 = vunpack.c.l.bf16 %v103
    %v402 = vunpack.c.h.bf16 %v103
    %v403 = vunpack.c.l.bf16 %v104
    %v404 = vunpack.c.h.bf16 %v104
    %v405 = vunpack.c.l.bf16 %v105
    %v406 = vunpack.c.h.bf16 %v105
    %v407 = vunpack.c.l.bf16 %v106
    %v408 = vunpack.c.h.bf16 %v106
    %v409 = vunpack.c.l.bf16 %v107
    %v410 = vunpack.c.h.bf16 %v107
    %v411 = vunpack.c.l.bf16 %v108
    %v412 = vunpack.c.h.bf16 %v108
    %v413 = vunpack.c.l.bf16 %v109
    %v414 = vunpack.c.h.bf16 %v109
    %v415 = vunpack.c.l.bf16 %v110
    %v416 = vunpack.c.h.bf16 %v110
    %v417 = vunpack.c.l.bf16 %v111
    %v418 = vunpack.c.h.bf16 %v111
    %v419 = vunpack.c.l.bf16 %v112
    %v420 = vunpack.c.h.bf16 %v112
    %v421 = vunpack.c.l.bf16 %v113
    %v422 = vunpack.c.h.bf16 %v113
    %v423 = vunpack.c.l.bf16 %v114
    %v424 = vunpack.c.h.bf16 %v114
    %v425 = vunpack.c.l.bf16 %v115
    %v426 = vunpack.c.h.bf16 %v115
    %v427 = vunpack.c.l.bf16 %v116
    %v428 = vunpack.c.h.bf16 %v116
    %v429 = vunpack.c.l.bf16 %v117
    %v430 = vunpack.c.h.bf16 %v117
    %v431 = vunpack.c.l.bf16 %v118
    %v432 = vunpack.c.h.bf16 %v118
    %v433 = vunpack.c.l.bf16 %v119
    %v434 = vunpack.c.h.bf16 %v119
    %v435 = vunpack.c.l.bf16 %v120
    %v436 = vunpack.c.h.bf16 %v120
    %v437 = vunpack.c.l.bf16 %v121
    %v438 = vunpack.c.h.bf16 %v121
    %v439 = vunpack.c.l.bf16 %v122
    %v440 = vunpack.c.h.bf16 %v122
    %v441 = vunpack.c.l.bf16 %v123
    %v442 = vunpack.c.h.bf16 %v123
    %v443 = vunpack.c.l.bf16 %v124
    %v444 = vunpack.c.h.bf16 %v124
    %v445 = vunpack.c.l.bf16 %v125
    %v446 = vunpack.c.h.bf16 %v125
    %v447 = vunpack.c.l.bf16 %v126
    %v448 = vunpack.c.h.bf16 %v126
    %v449 = vunpack.c.l.bf16 %v127
    %v450 = vunpack.c.h.bf16 %v127
    %v451 = vunpack.c.l.bf16 %v128
    %v452 = vunpack.c.h.bf16 %v128
    %v453 = vunpack.c.l.bf16 %v129
    %v454 = vunpack.c.h.bf16 %v129
    %v455 = vunpack.c.l.bf16 %v130
    %v456 = vunpack.c.h.bf16 %v130
    %v457 = vunpack.c.l.bf16 %v131
    %v458 = vunpack.c.h.bf16 %v131
    %v459 = vunpack.c.l.bf16 %v132
    %v460 = vunpack.c.h.bf16 %v132
    %v461 = vunpack.c.l.bf16 %v133
    %v462 = vunpack.c.h.bf16 %v133
    %v463 = vunpack.c.l.bf16 %v134
    %v464 = vunpack.c.h.bf16 %v134
    %v465 = vunpack.c.l.bf16 %v135
    %v466 = vunpack.c.h.bf16 %v135
    %v467 = vunpack.c.l.bf16 %v136
    %v468 = vunpack.c.h.bf16 %v136
    %v469 = vunpack.c.l.bf16 %v137
    %v470 = vunpack.c.h.bf16 %v137
    %v471 = vunpack.c.l.bf16 %v138
    %v472 = vunpack.c.h.bf16 %v138
    %v473 = vunpack.c.l.bf16 %v139
    %v474 = vunpack.c.h.bf16 %v139
    %v475 = vunpack.c.l.bf16 %v140
    %v476 = vunpack.c.h.bf16 %v140
    %v477 = vunpack.c.l.bf16 %v141
    %v478 = vunpack.c.h.bf16 %v141
    %v479 = vunpack.c.l.bf16 %v142
    %v480 = vunpack.c.h.bf16 %v142
    %v481 = vunpack.c.l.bf16 %v143
    %v482 = vunpack.c.h.bf16 %v143
    %v483 = vunpack.c.l.bf16 %v144
    %v484 = vunpack.c.h.bf16 %v144
    %v485 = vunpack.c.l.bf16 %v145
    %v486 = vunpack.c.h.bf16 %v145
    %v487 = vunpack.c.l.bf16 %v146
    %v488 = vunpack.c.h.bf16 %v146
    %v489 = vunpack.c.l.bf16 %v147
    %v490 = vunpack.c.h.bf16 %v147
    %v491 = vunpack.c.l.bf16 %v148
    %v492 = vunpack.c.h.bf16 %v148
    %v493 = vunpack.c.l.bf16 %v149
    %v494 = vunpack.c.h.bf16 %v149
    %v495 = vunpack.c.l.bf16 %v150
    %v496 = vunpack.c.h.bf16 %v150
    %v497 = vunpack.c.l.bf16 %v151
    %v498 = vunpack.c.h.bf16 %v151
    %v499 = vunpack.c.l.bf16 %v152
    %v500 = vunpack.c.h.bf16 %v152
    %v501 = vunpack.c.l.bf16 %v153
    %v502 = vunpack.c.h.bf16 %v153
    %v503 = vunpack.c.l.bf16 %v154
    %v504 = vunpack.c.h.bf16 %v154
    %v505 = vunpack.c.l.bf16 %v155
    %v506 = vunpack.c.h.bf16 %v155
    %v507 = vunpack.c.l.bf16 %v156
    %v508 = vunpack.c.h.bf16 %v156
    %v509 = vunpack.c.l.bf16 %v157
    %v510 = vunpack.c.h.bf16 %v157
    %v511 = vunpack.c.l.bf16 %v158
    %v512 = vunpack.c.h.bf16 %v158
    %v513 = vunpack.c.l.bf16 %v159
    %v514 = vunpack.c.h.bf16 %v159
    %v515 = vunpack.c.l.bf16 %v160
    %v516 = vunpack.c.h.bf16 %v160
    %v517 = vunpack.c.l.bf16 %v161
    %v518 = vunpack.c.h.bf16 %v161
    %v519 = vunpack.c.l.bf16 %v162
    %v520 = vunpack.c.h.bf16 %v162
    %v521 = vunpack.c.l.bf16 %v163
    %v522 = vunpack.c.h.bf16 %v163
    %v523 = vunpack.c.l.bf16 %v164
    %v524 = vunpack.c.h.bf16 %v164
    %v525 = vunpack.c.l.bf16 %v165
    %v526 = vunpack.c.h.bf16 %v165
    %v527 = vunpack.c.l.bf16 %v166
    %v528 = vunpack.c.h.bf16 %v166
    %v529 = vunpack.c.l.bf16 %v167
    %v530 = vunpack.c.h.bf16 %v167
    %v531 = vunpack.c.l.bf16 %v168
    %v532 = vunpack.c.h.bf16 %v168
    %v533 = vunpack.c.l.bf16 %v169
    %v534 = vunpack.c.h.bf16 %v169
    %v535 = vunpack.c.l.bf16 %v170
    %v536 = vunpack.c.h.bf16 %v170
    %v537 = vunpack.c.l.bf16 %v171
    %v538 = vunpack.c.h.bf16 %v171
    %v539 = vunpack.c.l.bf16 %v172
    %v540 = vunpack.c.h.bf16 %v172
    %v541 = vunpack.c.l.bf16 %v173
    %v542 = vunpack.c.h.bf16 %v173
    %v543 = vunpack.c.l.bf16 %v174
    %v544 = vunpack.c.h.bf16 %v174
    %v545 = vunpack.c.l.bf16 %v175
    %v546 = vunpack.c.h.bf16 %v175
    %v547 = vunpack.c.l.bf16 %v176
    %v548 = vunpack.c.h.bf16 %v176
    %v549 = vunpack.c.l.bf16 %v177
    %v550 = vunpack.c.h.bf16 %v177
    %v551 = vunpack.c.l.bf16 %v178
    %v552 = vunpack.c.h.bf16 %v178
    %v553 = vunpack.c.l.bf16 %v179
    %v554 = vunpack.c.h.bf16 %v179
    %v555 = vunpack.c.l.bf16 %v180
    %v556 = vunpack.c.h.bf16 %v180
    %v557 = vunpack.c.l.bf16 %v181
    %v558 = vunpack.c.h.bf16 %v181
    %v559 = vunpack.c.l.bf16 %v182
    %v560 = vunpack.c.h.bf16 %v182
    %v561 = vunpack.c.l.bf16 %v183
    %v562 = vunpack.c.h.bf16 %v183
    %v563 = vunpack.c.l.bf16 %v184
    %v564 = vunpack.c.h.bf16 %v184
    %v565 = vunpack.c.l.bf16 %v185
    %v566 = vunpack.c.h.bf16 %v185
    %v567 = vunpack.c.l.bf16 %v186
    %v568 = vunpack.c.h.bf16 %v186
    %v569 = vunpack.c.l.bf16 %v187
    %v570 = vunpack.c.h.bf16 %v187
    %v571 = vunpack.c.l.bf16 %v188
    %v572 = vunpack.c.h.bf16 %v188
    %v573 = vunpack.c.l.bf16 %v189
    %v574 = vunpack.c.h.bf16 %v189
    %v575 = vunpack.c.l.bf16 %v190
    %v576 = vunpack.c.h.bf16 %v190
    %v577 = vunpack.c.l.bf16 %v191
    %v578 = vunpack.c.h.bf16 %v191
    %v579 = vunpack.c.l.bf16 %v192
    %v580 = vunpack.c.h.bf16 %v192
    %v581 = vunpack.c.l.bf16 %v193
    %v582 = vunpack.c.h.bf16 %v193
    %v583 = vunpack.c.l.bf16 %v194
    %v584 = vunpack.c.h.bf16 %v194
    %v585 = vunpack.c.l.bf16 %v195
    %v586 = vunpack.c.h.bf16 %v195
    %v587 = vunpack.c.l.bf16 %v196
    %v588 = vunpack.c.h.bf16 %v196
    %v589 = vunpack.c.l.bf16 %v197
    %v590 = vunpack.c.h.bf16 %v197
    %v591 = vunpack.c.l.bf16 %v198
    %v592 = vunpack.c.h.bf16 %v198
    %v593 = vunpack.c.l.bf16 %v199
    %v594 = vunpack.c.h.bf16 %v199
    %v595 = vunpack.c.l.bf16 %v200
    %v596 = vunpack.c.h.bf16 %v200
    %v597 = vunpack.c.l.bf16 %v201
    %v598 = vunpack.c.h.bf16 %v201
    %v599 = vunpack.c.l.bf16 %v202
    %v600 = vunpack.c.h.bf16 %v202
    %v601 = vunpack.c.l.bf16 %v203
    %v602 = vunpack.c.h.bf16 %v203
    %v603 = vunpack.c.l.bf16 %v204
    %v604 = vunpack.c.h.bf16 %v204
    %v605 = vunpack.c.l.bf16 %v205
    %v606 = vunpack.c.h.bf16 %v205
    %v607 = vunpack.c.l.bf16 %v206
    %v608 = vunpack.c.h.bf16 %v206
    %v609 = vunpack.c.l.bf16 %v207
    %v610 = vunpack.c.h.bf16 %v207
    %v611 = vunpack.c.l.bf16 %v208
    %v612 = vunpack.c.h.bf16 %v208
    %v613 = vunpack.c.l.bf16 %v209
    %v614 = vunpack.c.h.bf16 %v209
    %v615 = vunpack.c.l.bf16 %v210
    %v616 = vunpack.c.h.bf16 %v210
    %v617 = vunpack.c.l.bf16 %v211
    %v618 = vunpack.c.h.bf16 %v211
    %v619 = vunpack.c.l.bf16 %v212
    %v620 = vunpack.c.h.bf16 %v212
    %v621 = vunpack.c.l.bf16 %v213
    %v622 = vunpack.c.h.bf16 %v213
    %v623 = vunpack.c.l.bf16 %v214
    %v624 = vunpack.c.h.bf16 %v214
    %v625 = vunpack.c.l.bf16 %v215
    %v626 = vunpack.c.h.bf16 %v215
    %v627 = vunpack.c.l.bf16 %v216
    %v628 = vunpack.c.h.bf16 %v216
    %v629 = vunpack.c.l.bf16 %v217
    %v630 = vunpack.c.h.bf16 %v217
    %v631 = vunpack.c.l.bf16 %v218
    %v632 = vunpack.c.h.bf16 %v218
    %v633 = vunpack.c.l.bf16 %v219
    %v634 = vunpack.c.h.bf16 %v219
    %v635 = vunpack.c.l.bf16 %v220
    %v636 = vunpack.c.h.bf16 %v220
    %v637 = vunpack.c.l.bf16 %v221
    %v638 = vunpack.c.h.bf16 %v221
    %v639 = vunpack.c.l.bf16 %v222
    %v640 = vunpack.c.h.bf16 %v222
    %v641 = vunpack.c.l.bf16 %v223
    %v642 = vunpack.c.h.bf16 %v223
    %v643 = vunpack.c.l.bf16 %v224
    %v644 = vunpack.c.h.bf16 %v224
    %v645 = vunpack.c.l.bf16 %v225
    %v646 = vunpack.c.h.bf16 %v225
    %v647 = vunpack.c.l.bf16 %v226
    %v648 = vunpack.c.h.bf16 %v226
    %v649 = vunpack.c.l.bf16 %v227
    %v650 = vunpack.c.h.bf16 %v227
    %v651 = vunpack.c.l.bf16 %v228
    %v652 = vunpack.c.h.bf16 %v228
    %v653 = vunpack.c.l.bf16 %v229
    %v654 = vunpack.c.h.bf16 %v229
    %v655 = vunpack.c.l.bf16 %v230
    %v656 = vunpack.c.h.bf16 %v230
    %v657 = vunpack.c.l.bf16 %v231
    %v658 = vunpack.c.h.bf16 %v231
    %v659 = vunpack.c.l.bf16 %v232
    %v660 = vunpack.c.h.bf16 %v232
    %v661 = vunpack.c.l.bf16 %v233
    %v662 = vunpack.c.h.bf16 %v233
    %v663 = vunpack.c.l.bf16 %v234
    %v664 = vunpack.c.h.bf16 %v234
    %v665 = vunpack.c.l.bf16 %v235
    %v666 = vunpack.c.h.bf16 %v235
    %v667 = vunpack.c.l.bf16 %v236
    %v668 = vunpack.c.h.bf16 %v236
    %v669 = vunpack.c.l.bf16 %v237
    %v670 = vunpack.c.h.bf16 %v237
    %v671 = vunpack.c.l.bf16 %v238
    %v672 = vunpack.c.h.bf16 %v238
    %v673 = vunpack.c.l.bf16 %v239
    %v674 = vunpack.c.h.bf16 %v239
    %v675 = vunpack.c.l.bf16 %v240
    %v676 = vunpack.c.h.bf16 %v240
    %v677 = vunpack.c.l.bf16 %v241
    %v678 = vunpack.c.h.bf16 %v241
    %v679 = vunpack.c.l.bf16 %v242
    %v680 = vunpack.c.h.bf16 %v242
    %v681 = vunpack.c.l.bf16 %v243
    %v682 = vunpack.c.h.bf16 %v243
    %v683 = vunpack.c.l.bf16 %v244
    %v684 = vunpack.c.h.bf16 %v244
    %v685 = vunpack.c.l.bf16 %v245
    %v686 = vunpack.c.h.bf16 %v245
    %v687 = vunpack.c.l.bf16 %v246
    %v688 = vunpack.c.h.bf16 %v246
    %v689 = vunpack.c.l.bf16 %v247
    %v690 = vunpack.c.h.bf16 %v247
    %v691 = vunpack.c.l.bf16 %v248
    %v692 = vunpack.c.h.bf16 %v248
    %v693 = vunpack.c.l.bf16 %v249
    %v694 = vunpack.c.h.bf16 %v249
    %v695 = vunpack.c.l.bf16 %v250
    %v696 = vunpack.c.h.bf16 %v250
    %v697 = vunpack.c.l.bf16 %v251
    %v698 = vunpack.c.h.bf16 %v251
    %v699 = vunpack.c.l.bf16 %v252
    %v700 = vunpack.c.h.bf16 %v252
    %v701 = vunpack.c.l.bf16 %v253
    %v702 = vunpack.c.h.bf16 %v253
    %v703 = vunpack.c.l.bf16 %v254
    %v704 = vunpack.c.h.bf16 %v254
    %v705 = vunpack.c.l.bf16 %v255
    %v706 = vunpack.c.h.bf16 %v255
    %v707 = vunpack.c.l.bf16 %v256
    %v708 = vunpack.c.h.bf16 %v256
    %v709 = vunpack.c.l.bf16 %v257
    %v710 = vunpack.c.h.bf16 %v257
    %v711 = vunpack.c.l.bf16 %v258
    %v712 = vunpack.c.h.bf16 %v258
    %v713 = vunpack.c.l.bf16 %v259
    %v714 = vunpack.c.h.bf16 %v259
    %v715 = vunpack.c.l.bf16 %v260
    %v716 = vunpack.c.h.bf16 %v260
    %v717 = vunpack.c.l.bf16 %v261
    %v718 = vunpack.c.h.bf16 %v261
    %v719 = vunpack.c.l.bf16 %v262
    %v720 = vunpack.c.h.bf16 %v262
    %v721 = vunpack.c.l.bf16 %v263
    %v722 = vunpack.c.h.bf16 %v263
    %v723 = vunpack.c.l.bf16 %v264
    %v724 = vunpack.c.h.bf16 %v264
    %v725 = vunpack.c.l.bf16 %v265
    %v726 = vunpack.c.h.bf16 %v265
    %v727 = vunpack.c.l.bf16 %v266
    %v728 = vunpack.c.h.bf16 %v266
    %v729 = vunpack.c.l.bf16 %v267
    %v730 = vunpack.c.h.bf16 %v267
    %v731 = vunpack.c.l.bf16 %v268
    %v732 = vunpack.c.h.bf16 %v268
    %v733 = vunpack.c.l.bf16 %v269
    %v734 = vunpack.c.h.bf16 %v269
    %v735 = vunpack.c.l.bf16 %v270
    %v736 = vunpack.c.h.bf16 %v270
    %v737 = vunpack.c.l.bf16 %v271
    %v738 = vunpack.c.h.bf16 %v271
    %v739 = vunpack.c.l.bf16 %v272
    %v740 = vunpack.c.h.bf16 %v272
    %v741 = vunpack.c.l.bf16 %v273
    %v742 = vunpack.c.h.bf16 %v273
    %v743 = vunpack.c.l.bf16 %v274
    %v744 = vunpack.c.h.bf16 %v274
    %v745 = vunpack.c.l.bf16 %v275
    %v746 = vunpack.c.h.bf16 %v275
    %v747 = vunpack.c.l.bf16 %v276
    %v748 = vunpack.c.h.bf16 %v276
    %v749 = vunpack.c.l.bf16 %v277
    %v750 = vunpack.c.h.bf16 %v277
    %v751 = vunpack.c.l.bf16 %v278
    %v752 = vunpack.c.h.bf16 %v278
    %v753 = vunpack.c.l.bf16 %v279
    %v754 = vunpack.c.h.bf16 %v279
    %v755 = vunpack.c.l.bf16 %v280
    %v756 = vunpack.c.h.bf16 %v280
    %v757 = vunpack.c.l.bf16 %v281
    %v758 = vunpack.c.h.bf16 %v281
    %v759 = vunpack.c.l.bf16 %v282
    %v760 = vunpack.c.h.bf16 %v282
    %v761 = vunpack.c.l.bf16 %v283
    %v762 = vunpack.c.h.bf16 %v283
    %v763 = vunpack.c.l.bf16 %v284
    %v764 = vunpack.c.h.bf16 %v284
    %v765 = vunpack.c.l.bf16 %v285
    %v766 = vunpack.c.h.bf16 %v285
    %v767 = vunpack.c.l.bf16 %v286
    %v768 = vunpack.c.h.bf16 %v286
    %v769 = vunpack.c.l.bf16 %v287
    %v770 = vunpack.c.h.bf16 %v287
    %v771 = vunpack.c.l.bf16 %v288
    %v772 = vunpack.c.h.bf16 %v288
    %v773 = vunpack.c.l.bf16 %v289
    %v774 = vunpack.c.h.bf16 %v289
    %v775 = vunpack.c.l.bf16 %v290
    %v776 = vunpack.c.h.bf16 %v290
    %v777 = vunpack.c.l.bf16 %v291
    %v778 = vunpack.c.h.bf16 %v291
    %v779 = vunpack.c.l.bf16 %v292
    %v780 = vunpack.c.h.bf16 %v292
    %v781 = vunpack.c.l.bf16 %v293
    %v782 = vunpack.c.h.bf16 %v293
    %v783 = vunpack.c.l.bf16 %v294
    %v784 = vunpack.c.h.bf16 %v294
    %v785 = vunpack.c.l.bf16 %v295
    %v786 = vunpack.c.h.bf16 %v295
    %v787 = vunpack.c.l.bf16 %v296
    %v788 = vunpack.c.h.bf16 %v296
    %v789 = vunpack.c.l.bf16 %v297
    %v790 = vunpack.c.h.bf16 %v297
    %v791 = vunpack.c.l.bf16 %v298
    %v792 = vunpack.c.h.bf16 %v298
    %v793 = vunpack.c.l.bf16 %v299
    %v794 = vunpack.c.h.bf16 %v299
    %v795 = vunpack.c.l.bf16 %v300
    %v796 = vunpack.c.h.bf16 %v300
    %v797 = vunpack.c.l.bf16 %v301
    %v798 = vunpack.c.h.bf16 %v301
    %v799 = vunpack.c.l.bf16 %v302
    %v800 = vunpack.c.h.bf16 %v302
    %v801 = vunpack.c.l.bf16 %v303
    %v802 = vunpack.c.h.bf16 %v303
    %v803 = vunpack.c.l.bf16 %v304
    %v804 = vunpack.c.h.bf16 %v304
    %v805 = vunpack.c.l.bf16 %v305
    %v806 = vunpack.c.h.bf16 %v305
    %v807 = vunpack.c.l.bf16 %v306
    %v808 = vunpack.c.h.bf16 %v306
    %v809 = vunpack.c.l.bf16 %v307
    %v810 = vunpack.c.h.bf16 %v307
    %v811 = vunpack.c.l.bf16 %v308
    %v812 = vunpack.c.h.bf16 %v308
    %v813 = vunpack.c.l.bf16 %v309
    %v814 = vunpack.c.h.bf16 %v309
    %v815 = vunpack.c.l.bf16 %v310
    %v816 = vunpack.c.h.bf16 %v310
    %v817 = vunpack.c.l.bf16 %v311
    %v818 = vunpack.c.h.bf16 %v311
    %v819 = vunpack.c.l.bf16 %v312
    %v820 = vunpack.c.h.bf16 %v312
    %v821 = vunpack.c.l.bf16 %v313
    %v822 = vunpack.c.h.bf16 %v313
    %v823 = vunpack.c.l.bf16 %v314
    %v824 = vunpack.c.h.bf16 %v314
    %v825 = vunpack.c.l.bf16 %v315
    %v826 = vunpack.c.h.bf16 %v315
    %v827 = vunpack.c.l.bf16 %v316
    %v828 = vunpack.c.h.bf16 %v316
    %v829 = vld [vmem:[#allocation2] sm:$0xff]
    %v830 = vld [vmem:[#allocation2 + $0x8] sm:$0xff]
    %v831 = vld [vmem:[#allocation2 + $0x10] sm:$0xff]
    %v832 = vld [vmem:[#allocation2 + $0x18] sm:$0xff]
    %v833 = vld [vmem:[#allocation2 + $0x20] sm:$0xff]
    %v834 = vld [vmem:[#allocation2 + $0x28] sm:$0xff]
    %v835 = vld [vmem:[#allocation2 + $0x30] sm:$0xff]
    %v836 = vld [vmem:[#allocation2 + $0x38] sm:$0xff]
    %v837 = vld [vmem:[#allocation2 + $0x40] sm:$0xff]
    %v838 = vld [vmem:[#allocation2 + $0x48] sm:$0xff]
    %v839 = vld [vmem:[#allocation2 + $0x50] sm:$0xff]
    %v840 = vld [vmem:[#allocation2 + $0x58] sm:$0xff]
    %v841 = vld [vmem:[#allocation2 + $0x60] sm:$0xff]
    %v842 = vld [vmem:[#allocation2 + $0x68] sm:$0xff]
    %v843 = vld [vmem:[#allocation2 + $0x70] sm:$0xff]
    %v844 = vld [vmem:[#allocation2 + $0x78] sm:$0xff]
    %845 = vmatpush.msra.mxu0 %v347
    %846 = vmatpush.msra.mxu0 %v345
    %847 = vmatpush.msra.mxu0 %v343
    %848 = vmatpush.msra.mxu0 %v341
    %849 = vmatpush.msra.mxu0 %v339
    %850 = vmatpush.msra.mxu0 %v337
    %851 = vmatpush.msra.mxu0 %v335
    %852 = vmatpush.msra.mxu0 %v333
    %853 = vmatpush.msra.mxu0 %v331
    %854 = vmatpush.msra.mxu0 %v329
    %855 = vmatpush.msra.mxu0 %v327
    %856 = vmatpush.msra.mxu0 %v325
    %857 = vmatpush.msra.mxu0 %v323
    %858 = vmatpush.msra.mxu0 %v321
    %859 = vmatpush.msra.mxu0 %v319
    %860 = vmatpush.msra.mxu0 %v317
    %861 = vmatmul.f32.gmra.mxu0 %v829
    %v862 = vpop.f32.mrf.mxu0
    %v863 = vadd.f32 0.0, %v862
    %864 = vdwg.mxu0
    %865 = vmatpush.msra.mxu0 %v379
    %866 = vmatpush.msra.mxu0 %v377
    %867 = vmatpush.msra.mxu0 %v375
    %868 = vmatpush.msra.mxu0 %v373
    %869 = vmatpush.msra.mxu0 %v371
    %870 = vmatpush.msra.mxu0 %v369
    %871 = vmatpush.msra.mxu0 %v367
    %872 = vmatpush.msra.mxu0 %v365
    %873 = vmatpush.msra.mxu0 %v363
    %874 = vmatpush.msra.mxu0 %v361
    %875 = vmatpush.msra.mxu0 %v359
    %876 = vmatpush.msra.mxu0 %v357
    %877 = vmatpush.msra.mxu0 %v355
    %878 = vmatpush.msra.mxu0 %v353
    %879 = vmatpush.msra.mxu0 %v351
    %880 = vmatpush.msra.mxu0 %v349
    %881 = vmatmul.f32.gmra.mxu0 %v830
    %v882 = vpop.f32.mrf.mxu0
    %v883 = vadd.f32 %v863, %v882
    %884 = vdwg.mxu0
    %885 = vmatpush.msra.mxu0 %v411
    %886 = vmatpush.msra.mxu0 %v409
    %887 = vmatpush.msra.mxu0 %v407
    %888 = vmatpush.msra.mxu0 %v405
    %889 = vmatpush.msra.mxu0 %v403
    %890 = vmatpush.msra.mxu0 %v401
    %891 = vmatpush.msra.mxu0 %v399
    %892 = vmatpush.msra.mxu0 %v397
    %893 = vmatpush.msra.mxu0 %v395
    %894 = vmatpush.msra.mxu0 %v393
    %895 = vmatpush.msra.mxu0 %v391
    %896 = vmatpush.msra.mxu0 %v389
    %897 = vmatpush.msra.mxu0 %v387
    %898 = vmatpush.msra.mxu0 %v385
    %899 = vmatpush.msra.mxu0 %v383
    %900 = vmatpush.msra.mxu0 %v381
    %901 = vmatmul.f32.gmra.mxu0 %v831
    %v902 = vpop.f32.mrf.mxu0
    %v903 = vadd.f32 %v883, %v902
    %904 = vdwg.mxu0
    %905 = vmatpush.msra.mxu0 %v443
    %906 = vmatpush.msra.mxu0 %v441
    %907 = vmatpush.msra.mxu0 %v439
    %908 = vmatpush.msra.mxu0 %v437
    %909 = vmatpush.msra.mxu0 %v435
    %910 = vmatpush.msra.mxu0 %v433
    %911 = vmatpush.msra.mxu0 %v431
    %912 = vmatpush.msra.mxu0 %v429
    %913 = vmatpush.msra.mxu0 %v427
    %914 = vmatpush.msra.mxu0 %v425
    %915 = vmatpush.msra.mxu0 %v423
    %916 = vmatpush.msra.mxu0 %v421
    %917 = vmatpush.msra.mxu0 %v419
    %918 = vmatpush.msra.mxu0 %v417
    %919 = vmatpush.msra.mxu0 %v415
    %920 = vmatpush.msra.mxu0 %v413
    %921 = vmatmul.f32.gmra.mxu0 %v832
    %v922 = vpop.f32.mrf.mxu0
    %v923 = vadd.f32 %v903, %v922
    %924 = vdwg.mxu0
    %925 = vmatpush.msra.mxu0 %v475
    %926 = vmatpush.msra.mxu0 %v473
    %927 = vmatpush.msra.mxu0 %v471
    %928 = vmatpush.msra.mxu0 %v469
    %929 = vmatpush.msra.mxu0 %v467
    %930 = vmatpush.msra.mxu0 %v465
    %931 = vmatpush.msra.mxu0 %v463
    %932 = vmatpush.msra.mxu0 %v461
    %933 = vmatpush.msra.mxu0 %v459
    %934 = vmatpush.msra.mxu0 %v457
    %935 = vmatpush.msra.mxu0 %v455
    %936 = vmatpush.msra.mxu0 %v453
    %937 = vmatpush.msra.mxu0 %v451
    %938 = vmatpush.msra.mxu0 %v449
    %939 = vmatpush.msra.mxu0 %v447
    %940 = vmatpush.msra.mxu0 %v445
    %941 = vmatmul.f32.gmra.mxu0 %v833
    %v942 = vpop.f32.mrf.mxu0
    %v943 = vadd.f32 %v923, %v942
    %944 = vdwg.mxu0
    %945 = vmatpush.msra.mxu0 %v507
    %946 = vmatpush.msra.mxu0 %v505
    %947 = vmatpush.msra.mxu0 %v503
    %948 = vmatpush.msra.mxu0 %v501
    %949 = vmatpush.msra.mxu0 %v499
    %950 = vmatpush.msra.mxu0 %v497
    %951 = vmatpush.msra.mxu0 %v495
    %952 = vmatpush.msra.mxu0 %v493
    %953 = vmatpush.msra.mxu0 %v491
    %954 = vmatpush.msra.mxu0 %v489
    %955 = vmatpush.msra.mxu0 %v487
    %956 = vmatpush.msra.mxu0 %v485
    %957 = vmatpush.msra.mxu0 %v483
    %958 = vmatpush.msra.mxu0 %v481
    %959 = vmatpush.msra.mxu0 %v479
    %960 = vmatpush.msra.mxu0 %v477
    %961 = vmatmul.f32.gmra.mxu0 %v834
    %v962 = vpop.f32.mrf.mxu0
    %v963 = vadd.f32 %v943, %v962
    %964 = vdwg.mxu0
    %965 = vmatpush.msra.mxu0 %v539
    %966 = vmatpush.msra.mxu0 %v537
    %967 = vmatpush.msra.mxu0 %v535
    %968 = vmatpush.msra.mxu0 %v533
    %969 = vmatpush.msra.mxu0 %v531
    %970 = vmatpush.msra.mxu0 %v529
    %971 = vmatpush.msra.mxu0 %v527
    %972 = vmatpush.msra.mxu0 %v525
    %973 = vmatpush.msra.mxu0 %v523
    %974 = vmatpush.msra.mxu0 %v521
    %975 = vmatpush.msra.mxu0 %v519
    %976 = vmatpush.msra.mxu0 %v517
    %977 = vmatpush.msra.mxu0 %v515
    %978 = vmatpush.msra.mxu0 %v513
    %979 = vmatpush.msra.mxu0 %v511
    %980 = vmatpush.msra.mxu0 %v509
    %981 = vmatmul.f32.gmra.mxu0 %v835
    %v982 = vpop.f32.mrf.mxu0
    %v983 = vadd.f32 %v963, %v982
    %984 = vdwg.mxu0
    %985 = vmatpush.msra.mxu0 %v571
    %986 = vmatpush.msra.mxu0 %v569
    %987 = vmatpush.msra.mxu0 %v567
    %988 = vmatpush.msra.mxu0 %v565
    %989 = vmatpush.msra.mxu0 %v563
    %990 = vmatpush.msra.mxu0 %v561
    %991 = vmatpush.msra.mxu0 %v559
    %992 = vmatpush.msra.mxu0 %v557
    %993 = vmatpush.msra.mxu0 %v555
    %994 = vmatpush.msra.mxu0 %v553
    %995 = vmatpush.msra.mxu0 %v551
    %996 = vmatpush.msra.mxu0 %v549
    %997 = vmatpush.msra.mxu0 %v547
    %998 = vmatpush.msra.mxu0 %v545
    %999 = vmatpush.msra.mxu0 %v543
    %1000 = vmatpush.msra.mxu0 %v541
    %1001 = vmatmul.f32.gmra.mxu0 %v836
    %v1002 = vpop.f32.mrf.mxu0
    %v1003 = vadd.f32 %v983, %v1002
    %1004 = vdwg.mxu0
    %1005 = vmatpush.msra.mxu0 %v603
    %1006 = vmatpush.msra.mxu0 %v601
    %1007 = vmatpush.msra.mxu0 %v599
    %1008 = vmatpush.msra.mxu0 %v597
    %1009 = vmatpush.msra.mxu0 %v595
    %1010 = vmatpush.msra.mxu0 %v593
    %1011 = vmatpush.msra.mxu0 %v591
    %1012 = vmatpush.msra.mxu0 %v589
    %1013 = vmatpush.msra.mxu0 %v587
    %1014 = vmatpush.msra.mxu0 %v585
    %1015 = vmatpush.msra.mxu0 %v583
    %1016 = vmatpush.msra.mxu0 %v581
    %1017 = vmatpush.msra.mxu0 %v579
    %1018 = vmatpush.msra.mxu0 %v577
    %1019 = vmatpush.msra.mxu0 %v575
    %1020 = vmatpush.msra.mxu0 %v573
    %1021 = vmatmul.f32.gmra.mxu0 %v837
    %v1022 = vpop.f32.mrf.mxu0
    %v1023 = vadd.f32 %v1003, %v1022
    %1024 = vdwg.mxu0
    %1025 = vmatpush.msra.mxu0 %v635
    %1026 = vmatpush.msra.mxu0 %v633
    %1027 = vmatpush.msra.mxu0 %v631
    %1028 = vmatpush.msra.mxu0 %v629
    %1029 = vmatpush.msra.mxu0 %v627
    %1030 = vmatpush.msra.mxu0 %v625
    %1031 = vmatpush.msra.mxu0 %v623
    %1032 = vmatpush.msra.mxu0 %v621
    %1033 = vmatpush.msra.mxu0 %v619
    %1034 = vmatpush.msra.mxu0 %v617
    %1035 = vmatpush.msra.mxu0 %v615
    %1036 = vmatpush.msra.mxu0 %v613
    %1037 = vmatpush.msra.mxu0 %v611
    %1038 = vmatpush.msra.mxu0 %v609
    %1039 = vmatpush.msra.mxu0 %v607
    %1040 = vmatpush.msra.mxu0 %v605
    %1041 = vmatmul.f32.gmra.mxu0 %v838
    %v1042 = vpop.f32.mrf.mxu0
    %v1043 = vadd.f32 %v1023, %v1042
    %1044 = vdwg.mxu0
    %1045 = vmatpush.msra.mxu0 %v667
    %1046 = vmatpush.msra.mxu0 %v665
    %1047 = vmatpush.msra.mxu0 %v663
    %1048 = vmatpush.msra.mxu0 %v661
    %1049 = vmatpush.msra.mxu0 %v659
    %1050 = vmatpush.msra.mxu0 %v657
    %1051 = vmatpush.msra.mxu0 %v655
    %1052 = vmatpush.msra.mxu0 %v653
    %1053 = vmatpush.msra.mxu0 %v651
    %1054 = vmatpush.msra.mxu0 %v649
    %1055 = vmatpush.msra.mxu0 %v647
    %1056 = vmatpush.msra.mxu0 %v645
    %1057 = vmatpush.msra.mxu0 %v643
    %1058 = vmatpush.msra.mxu0 %v641
    %1059 = vmatpush.msra.mxu0 %v639
    %1060 = vmatpush.msra.mxu0 %v637
    %1061 = vmatmul.f32.gmra.mxu0 %v839
    %v1062 = vpop.f32.mrf.mxu0
    %v1063 = vadd.f32 %v1043, %v1062
    %1064 = vdwg.mxu0
    %1065 = vmatpush.msra.mxu0 %v699
    %1066 = vmatpush.msra.mxu0 %v697
    %1067 = vmatpush.msra.mxu0 %v695
    %1068 = vmatpush.msra.mxu0 %v693
    %1069 = vmatpush.msra.mxu0 %v691
    %1070 = vmatpush.msra.mxu0 %v689
    %1071 = vmatpush.msra.mxu0 %v687
    %1072 = vmatpush.msra.mxu0 %v685
    %1073 = vmatpush.msra.mxu0 %v683
    %1074 = vmatpush.msra.mxu0 %v681
    %1075 = vmatpush.msra.mxu0 %v679
    %1076 = vmatpush.msra.mxu0 %v677
    %1077 = vmatpush.msra.mxu0 %v675
    %1078 = vmatpush.msra.mxu0 %v673
    %1079 = vmatpush.msra.mxu0 %v671
    %1080 = vmatpush.msra.mxu0 %v669
    %1081 = vmatmul.f32.gmra.mxu0 %v840
    %v1082 = vpop.f32.mrf.mxu0
    %v1083 = vadd.f32 %v1063, %v1082
    %1084 = vdwg.mxu0
    %1085 = vmatpush.msra.mxu0 %v731
    %1086 = vmatpush.msra.mxu0 %v729
    %1087 = vmatpush.msra.mxu0 %v727
    %1088 = vmatpush.msra.mxu0 %v725
    %1089 = vmatpush.msra.mxu0 %v723
    %1090 = vmatpush.msra.mxu0 %v721
    %1091 = vmatpush.msra.mxu0 %v719
    %1092 = vmatpush.msra.mxu0 %v717
    %1093 = vmatpush.msra.mxu0 %v715
    %1094 = vmatpush.msra.mxu0 %v713
    %1095 = vmatpush.msra.mxu0 %v711
    %1096 = vmatpush.msra.mxu0 %v709
    %1097 = vmatpush.msra.mxu0 %v707
    %1098 = vmatpush.msra.mxu0 %v705
    %1099 = vmatpush.msra.mxu0 %v703
    %1100 = vmatpush.msra.mxu0 %v701
    %1101 = vmatmul.f32.gmra.mxu0 %v841
    %v1102 = vpop.f32.mrf.mxu0
    %v1103 = vadd.f32 %v1083, %v1102
    %1104 = vdwg.mxu0
    %1105 = vmatpush.msra.mxu0 %v763
    %1106 = vmatpush.msra.mxu0 %v761
    %1107 = vmatpush.msra.mxu0 %v759
    %1108 = vmatpush.msra.mxu0 %v757
    %1109 = vmatpush.msra.mxu0 %v755
    %1110 = vmatpush.msra.mxu0 %v753
    %1111 = vmatpush.msra.mxu0 %v751
    %1112 = vmatpush.msra.mxu0 %v749
    %1113 = vmatpush.msra.mxu0 %v747
    %1114 = vmatpush.msra.mxu0 %v745
    %1115 = vmatpush.msra.mxu0 %v743
    %1116 = vmatpush.msra.mxu0 %v741
    %1117 = vmatpush.msra.mxu0 %v739
    %1118 = vmatpush.msra.mxu0 %v737
    %1119 = vmatpush.msra.mxu0 %v735
    %1120 = vmatpush.msra.mxu0 %v733
    %1121 = vmatmul.f32.gmra.mxu0 %v842
    %v1122 = vpop.f32.mrf.mxu0
    %v1123 = vadd.f32 %v1103, %v1122
    %1124 = vdwg.mxu0
    %1125 = vmatpush.msra.mxu0 %v795
    %1126 = vmatpush.msra.mxu0 %v793
    %1127 = vmatpush.msra.mxu0 %v791
    %1128 = vmatpush.msra.mxu0 %v789
    %1129 = vmatpush.msra.mxu0 %v787
    %1130 = vmatpush.msra.mxu0 %v785
    %1131 = vmatpush.msra.mxu0 %v783
    %1132 = vmatpush.msra.mxu0 %v781
    %1133 = vmatpush.msra.mxu0 %v779
    %1134 = vmatpush.msra.mxu0 %v777
    %1135 = vmatpush.msra.mxu0 %v775
    %1136 = vmatpush.msra.mxu0 %v773
    %1137 = vmatpush.msra.mxu0 %v771
    %1138 = vmatpush.msra.mxu0 %v769
    %1139 = vmatpush.msra.mxu0 %v767
    %1140 = vmatpush.msra.mxu0 %v765
    %1141 = vmatmul.f32.gmra.mxu0 %v843
    %v1142 = vpop.f32.mrf.mxu0
    %v1143 = vadd.f32 %v1123, %v1142
    %1144 = vdwg.mxu0
    %1145 = vmatpush.msra.mxu0 %v827
    %1146 = vmatpush.msra.mxu0 %v825
    %1147 = vmatpush.msra.mxu0 %v823
    %1148 = vmatpush.msra.mxu0 %v821
    %1149 = vmatpush.msra.mxu0 %v819
    %1150 = vmatpush.msra.mxu0 %v817
    %1151 = vmatpush.msra.mxu0 %v815
    %1152 = vmatpush.msra.mxu0 %v813
    %1153 = vmatpush.msra.mxu0 %v811
    %1154 = vmatpush.msra.mxu0 %v809
    %1155 = vmatpush.msra.mxu0 %v807
    %1156 = vmatpush.msra.mxu0 %v805
    %1157 = vmatpush.msra.mxu0 %v803
    %1158 = vmatpush.msra.mxu0 %v801
    %1159 = vmatpush.msra.mxu0 %v799
    %1160 = vmatpush.msra.mxu0 %v797
    %1161 = vmatmul.f32.gmra.mxu0 %v844
    %v1162 = vpop.f32.mrf.mxu0
    %v1163 = vadd.f32 %v1143, %v1162
    %1164 = vdwg.mxu0
    %1165 = vmatpush.msra.mxu0 %v348
    %1166 = vmatpush.msra.mxu0 %v346
    %1167 = vmatpush.msra.mxu0 %v344
    %1168 = vmatpush.msra.mxu0 %v342
    %1169 = vmatpush.msra.mxu0 %v340
    %1170 = vmatpush.msra.mxu0 %v338
    %1171 = vmatpush.msra.mxu0 %v336
    %1172 = vmatpush.msra.mxu0 %v334
    %1173 = vmatpush.msra.mxu0 %v332
    %1174 = vmatpush.msra.mxu0 %v330
    %1175 = vmatpush.msra.mxu0 %v328
    %1176 = vmatpush.msra.mxu0 %v326
    %1177 = vmatpush.msra.mxu0 %v324
    %1178 = vmatpush.msra.mxu0 %v322
    %1179 = vmatpush.msra.mxu0 %v320
    %1180 = vmatpush.msra.mxu0 %v318
    %1181 = vmatmul.f32.gmra.mxu0 %v829
    %v1182 = vpop.f32.mrf.mxu0
    %v1183 = vadd.f32 0.0, %v1182
    %1184 = vdwg.mxu0
    %1185 = vmatpush.msra.mxu0 %v380
    %1186 = vmatpush.msra.mxu0 %v378
    %1187 = vmatpush.msra.mxu0 %v376
    %1188 = vmatpush.msra.mxu0 %v374
    %1189 = vmatpush.msra.mxu0 %v372
    %1190 = vmatpush.msra.mxu0 %v370
    %1191 = vmatpush.msra.mxu0 %v368
    %1192 = vmatpush.msra.mxu0 %v366
    %1193 = vmatpush.msra.mxu0 %v364
    %1194 = vmatpush.msra.mxu0 %v362
    %1195 = vmatpush.msra.mxu0 %v360
    %1196 = vmatpush.msra.mxu0 %v358
    %1197 = vmatpush.msra.mxu0 %v356
    %1198 = vmatpush.msra.mxu0 %v354
    %1199 = vmatpush.msra.mxu0 %v352
    %1200 = vmatpush.msra.mxu0 %v350
    %1201 = vmatmul.f32.gmra.mxu0 %v830
    %v1202 = vpop.f32.mrf.mxu0
    %v1203 = vadd.f32 %v1183, %v1202
    %1204 = vdwg.mxu0
    %1205 = vmatpush.msra.mxu0 %v412
    %1206 = vmatpush.msra.mxu0 %v410
    %1207 = vmatpush.msra.mxu0 %v408
    %1208 = vmatpush.msra.mxu0 %v406
    %1209 = vmatpush.msra.mxu0 %v404
    %1210 = vmatpush.msra.mxu0 %v402
    %1211 = vmatpush.msra.mxu0 %v400
    %1212 = vmatpush.msra.mxu0 %v398
    %1213 = vmatpush.msra.mxu0 %v396
    %1214 = vmatpush.msra.mxu0 %v394
    %1215 = vmatpush.msra.mxu0 %v392
    %1216 = vmatpush.msra.mxu0 %v390
    %1217 = vmatpush.msra.mxu0 %v388
    %1218 = vmatpush.msra.mxu0 %v386
    %1219 = vmatpush.msra.mxu0 %v384
    %1220 = vmatpush.msra.mxu0 %v382
    %1221 = vmatmul.f32.gmra.mxu0 %v831
    %v1222 = vpop.f32.mrf.mxu0
    %v1223 = vadd.f32 %v1203, %v1222
    %1224 = vdwg.mxu0
    %1225 = vmatpush.msra.mxu0 %v444
    %1226 = vmatpush.msra.mxu0 %v442
    %1227 = vmatpush.msra.mxu0 %v440
    %1228 = vmatpush.msra.mxu0 %v438
    %1229 = vmatpush.msra.mxu0 %v436
    %1230 = vmatpush.msra.mxu0 %v434
    %1231 = vmatpush.msra.mxu0 %v432
    %1232 = vmatpush.msra.mxu0 %v430
    %1233 = vmatpush.msra.mxu0 %v428
    %1234 = vmatpush.msra.mxu0 %v426
    %1235 = vmatpush.msra.mxu0 %v424
    %1236 = vmatpush.msra.mxu0 %v422
    %1237 = vmatpush.msra.mxu0 %v420
    %1238 = vmatpush.msra.mxu0 %v418
    %1239 = vmatpush.msra.mxu0 %v416
    %1240 = vmatpush.msra.mxu0 %v414
    %1241 = vmatmul.f32.gmra.mxu0 %v832
    %v1242 = vpop.f32.mrf.mxu0
    %v1243 = vadd.f32 %v1223, %v1242
    %1244 = vdwg.mxu0
    %1245 = vmatpush.msra.mxu0 %v476
    %1246 = vmatpush.msra.mxu0 %v474
    %1247 = vmatpush.msra.mxu0 %v472
    %1248 = vmatpush.msra.mxu0 %v470
    %1249 = vmatpush.msra.mxu0 %v468
    %1250 = vmatpush.msra.mxu0 %v466
    %1251 = vmatpush.msra.mxu0 %v464
    %1252 = vmatpush.msra.mxu0 %v462
    %1253 = vmatpush.msra.mxu0 %v460
    %1254 = vmatpush.msra.mxu0 %v458
    %1255 = vmatpush.msra.mxu0 %v456
    %1256 = vmatpush.msra.mxu0 %v454
    %1257 = vmatpush.msra.mxu0 %v452
    %1258 = vmatpush.msra.mxu0 %v450
    %1259 = vmatpush.msra.mxu0 %v448
    %1260 = vmatpush.msra.mxu0 %v446
    %1261 = vmatmul.f32.gmra.mxu0 %v833
    %v1262 = vpop.f32.mrf.mxu0
    %v1263 = vadd.f32 %v1243, %v1262
    %1264 = vdwg.mxu0
    %1265 = vmatpush.msra.mxu0 %v508
    %1266 = vmatpush.msra.mxu0 %v506
    %1267 = vmatpush.msra.mxu0 %v504
    %1268 = vmatpush.msra.mxu0 %v502
    %1269 = vmatpush.msra.mxu0 %v500
    %1270 = vmatpush.msra.mxu0 %v498
    %1271 = vmatpush.msra.mxu0 %v496
    %1272 = vmatpush.msra.mxu0 %v494
    %1273 = vmatpush.msra.mxu0 %v492
    %1274 = vmatpush.msra.mxu0 %v490
    %1275 = vmatpush.msra.mxu0 %v488
    %1276 = vmatpush.msra.mxu0 %v486
    %1277 = vmatpush.msra.mxu0 %v484
    %1278 = vmatpush.msra.mxu0 %v482
    %1279 = vmatpush.msra.mxu0 %v480
    %1280 = vmatpush.msra.mxu0 %v478
    %1281 = vmatmul.f32.gmra.mxu0 %v834
    %v1282 = vpop.f32.mrf.mxu0
    %v1283 = vadd.f32 %v1263, %v1282
    %1284 = vdwg.mxu0
    %1285 = vmatpush.msra.mxu0 %v540
    %1286 = vmatpush.msra.mxu0 %v538
    %1287 = vmatpush.msra.mxu0 %v536
    %1288 = vmatpush.msra.mxu0 %v534
    %1289 = vmatpush.msra.mxu0 %v532
    %1290 = vmatpush.msra.mxu0 %v530
    %1291 = vmatpush.msra.mxu0 %v528
    %1292 = vmatpush.msra.mxu0 %v526
    %1293 = vmatpush.msra.mxu0 %v524
    %1294 = vmatpush.msra.mxu0 %v522
    %1295 = vmatpush.msra.mxu0 %v520
    %1296 = vmatpush.msra.mxu0 %v518
    %1297 = vmatpush.msra.mxu0 %v516
    %1298 = vmatpush.msra.mxu0 %v514
    %1299 = vmatpush.msra.mxu0 %v512
    %1300 = vmatpush.msra.mxu0 %v510
    %1301 = vmatmul.f32.gmra.mxu0 %v835
    %v1302 = vpop.f32.mrf.mxu0
    %v1303 = vadd.f32 %v1283, %v1302
    %1304 = vdwg.mxu0
    %1305 = vmatpush.msra.mxu0 %v572
    %1306 = vmatpush.msra.mxu0 %v570
    %1307 = vmatpush.msra.mxu0 %v568
    %1308 = vmatpush.msra.mxu0 %v566
    %1309 = vmatpush.msra.mxu0 %v564
    %1310 = vmatpush.msra.mxu0 %v562
    %1311 = vmatpush.msra.mxu0 %v560
    %1312 = vmatpush.msra.mxu0 %v558
    %1313 = vmatpush.msra.mxu0 %v556
    %1314 = vmatpush.msra.mxu0 %v554
    %1315 = vmatpush.msra.mxu0 %v552
    %1316 = vmatpush.msra.mxu0 %v550
    %1317 = vmatpush.msra.mxu0 %v548
    %1318 = vmatpush.msra.mxu0 %v546
    %1319 = vmatpush.msra.mxu0 %v544
    %1320 = vmatpush.msra.mxu0 %v542
    %1321 = vmatmul.f32.gmra.mxu0 %v836
    %v1322 = vpop.f32.mrf.mxu0
    %v1323 = vadd.f32 %v1303, %v1322
    %1324 = vdwg.mxu0
    %1325 = vmatpush.msra.mxu0 %v604
    %1326 = vmatpush.msra.mxu0 %v602
    %1327 = vmatpush.msra.mxu0 %v600
    %1328 = vmatpush.msra.mxu0 %v598
    %1329 = vmatpush.msra.mxu0 %v596
    %1330 = vmatpush.msra.mxu0 %v594
    %1331 = vmatpush.msra.mxu0 %v592
    %1332 = vmatpush.msra.mxu0 %v590
    %1333 = vmatpush.msra.mxu0 %v588
    %1334 = vmatpush.msra.mxu0 %v586
    %1335 = vmatpush.msra.mxu0 %v584
    %1336 = vmatpush.msra.mxu0 %v582
    %1337 = vmatpush.msra.mxu0 %v580
    %1338 = vmatpush.msra.mxu0 %v578
    %1339 = vmatpush.msra.mxu0 %v576
    %1340 = vmatpush.msra.mxu0 %v574
    %1341 = vmatmul.f32.gmra.mxu0 %v837
    %v1342 = vpop.f32.mrf.mxu0
    %v1343 = vadd.f32 %v1323, %v1342
    %1344 = vdwg.mxu0
    %1345 = vmatpush.msra.mxu0 %v636
    %1346 = vmatpush.msra.mxu0 %v634
    %1347 = vmatpush.msra.mxu0 %v632
    %1348 = vmatpush.msra.mxu0 %v630
    %1349 = vmatpush.msra.mxu0 %v628
    %1350 = vmatpush.msra.mxu0 %v626
    %1351 = vmatpush.msra.mxu0 %v624
    %1352 = vmatpush.msra.mxu0 %v622
    %1353 = vmatpush.msra.mxu0 %v620
    %1354 = vmatpush.msra.mxu0 %v618
    %1355 = vmatpush.msra.mxu0 %v616
    %1356 = vmatpush.msra.mxu0 %v614
    %1357 = vmatpush.msra.mxu0 %v612
    %1358 = vmatpush.msra.mxu0 %v610
    %1359 = vmatpush.msra.mxu0 %v608
    %1360 = vmatpush.msra.mxu0 %v606
    %1361 = vmatmul.f32.gmra.mxu0 %v838
    %v1362 = vpop.f32.mrf.mxu0
    %v1363 = vadd.f32 %v1343, %v1362
    %1364 = vdwg.mxu0
    %1365 = vmatpush.msra.mxu0 %v668
    %1366 = vmatpush.msra.mxu0 %v666
    %1367 = vmatpush.msra.mxu0 %v664
    %1368 = vmatpush.msra.mxu0 %v662
    %1369 = vmatpush.msra.mxu0 %v660
    %1370 = vmatpush.msra.mxu0 %v658
    %1371 = vmatpush.msra.mxu0 %v656
    %1372 = vmatpush.msra.mxu0 %v654
    %1373 = vmatpush.msra.mxu0 %v652
    %1374 = vmatpush.msra.mxu0 %v650
    %1375 = vmatpush.msra.mxu0 %v648
    %1376 = vmatpush.msra.mxu0 %v646
    %1377 = vmatpush.msra.mxu0 %v644
    %1378 = vmatpush.msra.mxu0 %v642
    %1379 = vmatpush.msra.mxu0 %v640
    %1380 = vmatpush.msra.mxu0 %v638
    %1381 = vmatmul.f32.gmra.mxu0 %v839
    %v1382 = vpop.f32.mrf.mxu0
    %v1383 = vadd.f32 %v1363, %v1382
    %1384 = vdwg.mxu0
    %1385 = vmatpush.msra.mxu0 %v700
    %1386 = vmatpush.msra.mxu0 %v698
    %1387 = vmatpush.msra.mxu0 %v696
    %1388 = vmatpush.msra.mxu0 %v694
    %1389 = vmatpush.msra.mxu0 %v692
    %1390 = vmatpush.msra.mxu0 %v690
    %1391 = vmatpush.msra.mxu0 %v688
    %1392 = vmatpush.msra.mxu0 %v686
    %1393 = vmatpush.msra.mxu0 %v684
    %1394 = vmatpush.msra.mxu0 %v682
    %1395 = vmatpush.msra.mxu0 %v680
    %1396 = vmatpush.msra.mxu0 %v678
    %1397 = vmatpush.msra.mxu0 %v676
    %1398 = vmatpush.msra.mxu0 %v674
    %1399 = vmatpush.msra.mxu0 %v672
    %1400 = vmatpush.msra.mxu0 %v670
    %1401 = vmatmul.f32.gmra.mxu0 %v840
    %v1402 = vpop.f32.mrf.mxu0
    %v1403 = vadd.f32 %v1383, %v1402
    %1404 = vdwg.mxu0
    %1405 = vmatpush.msra.mxu0 %v732
    %1406 = vmatpush.msra.mxu0 %v730
    %1407 = vmatpush.msra.mxu0 %v728
    %1408 = vmatpush.msra.mxu0 %v726
    %1409 = vmatpush.msra.mxu0 %v724
    %1410 = vmatpush.msra.mxu0 %v722
    %1411 = vmatpush.msra.mxu0 %v720
    %1412 = vmatpush.msra.mxu0 %v718
    %1413 = vmatpush.msra.mxu0 %v716
    %1414 = vmatpush.msra.mxu0 %v714
    %1415 = vmatpush.msra.mxu0 %v712
    %1416 = vmatpush.msra.mxu0 %v710
    %1417 = vmatpush.msra.mxu0 %v708
    %1418 = vmatpush.msra.mxu0 %v706
    %1419 = vmatpush.msra.mxu0 %v704
    %1420 = vmatpush.msra.mxu0 %v702
    %1421 = vmatmul.f32.gmra.mxu0 %v841
    %v1422 = vpop.f32.mrf.mxu0
    %v1423 = vadd.f32 %v1403, %v1422
    %1424 = vdwg.mxu0
    %1425 = vmatpush.msra.mxu0 %v764
    %1426 = vmatpush.msra.mxu0 %v762
    %1427 = vmatpush.msra.mxu0 %v760
    %1428 = vmatpush.msra.mxu0 %v758
    %1429 = vmatpush.msra.mxu0 %v756
    %1430 = vmatpush.msra.mxu0 %v754
    %1431 = vmatpush.msra.mxu0 %v752
    %1432 = vmatpush.msra.mxu0 %v750
    %1433 = vmatpush.msra.mxu0 %v748
    %1434 = vmatpush.msra.mxu0 %v746
    %1435 = vmatpush.msra.mxu0 %v744
    %1436 = vmatpush.msra.mxu0 %v742
    %1437 = vmatpush.msra.mxu0 %v740
    %1438 = vmatpush.msra.mxu0 %v738
    %1439 = vmatpush.msra.mxu0 %v736
    %1440 = vmatpush.msra.mxu0 %v734
    %1441 = vmatmul.f32.gmra.mxu0 %v842
    %v1442 = vpop.f32.mrf.mxu0
    %v1443 = vadd.f32 %v1423, %v1442
    %1444 = vdwg.mxu0
    %1445 = vmatpush.msra.mxu0 %v796
    %1446 = vmatpush.msra.mxu0 %v794
    %1447 = vmatpush.msra.mxu0 %v792
    %1448 = vmatpush.msra.mxu0 %v790
    %1449 = vmatpush.msra.mxu0 %v788
    %1450 = vmatpush.msra.mxu0 %v786
    %1451 = vmatpush.msra.mxu0 %v784
    %1452 = vmatpush.msra.mxu0 %v782
    %1453 = vmatpush.msra.mxu0 %v780
    %1454 = vmatpush.msra.mxu0 %v778
    %1455 = vmatpush.msra.mxu0 %v776
    %1456 = vmatpush.msra.mxu0 %v774
    %1457 = vmatpush.msra.mxu0 %v772
    %1458 = vmatpush.msra.mxu0 %v770
    %1459 = vmatpush.msra.mxu0 %v768
    %1460 = vmatpush.msra.mxu0 %v766
    %1461 = vmatmul.f32.gmra.mxu0 %v843
    %v1462 = vpop.f32.mrf.mxu0
    %v1463 = vadd.f32 %v1443, %v1462
    %1464 = vdwg.mxu0
    %1465 = vmatpush.msra.mxu0 %v828
    %1466 = vmatpush.msra.mxu0 %v826
    %1467 = vmatpush.msra.mxu0 %v824
    %1468 = vmatpush.msra.mxu0 %v822
    %1469 = vmatpush.msra.mxu0 %v820
    %1470 = vmatpush.msra.mxu0 %v818
    %1471 = vmatpush.msra.mxu0 %v816
    %1472 = vmatpush.msra.mxu0 %v814
    %1473 = vmatpush.msra.mxu0 %v812
    %1474 = vmatpush.msra.mxu0 %v810
    %1475 = vmatpush.msra.mxu0 %v808
    %1476 = vmatpush.msra.mxu0 %v806
    %1477 = vmatpush.msra.mxu0 %v804
    %1478 = vmatpush.msra.mxu0 %v802
    %1479 = vmatpush.msra.mxu0 %v800
    %1480 = vmatpush.msra.mxu0 %v798
    %1481 = vmatmul.f32.gmra.mxu0 %v844
    %v1482 = vpop.f32.mrf.mxu0
    %v1483 = vadd.f32 %v1463, %v1482
    %1484 = vdwg.mxu0
    %v1485 = vrot.slane %v1163, 4
    %v1486 = vadd.f32 %v1163, %v1485
    %v1487 = vrot.slane %v1486, 2
    %v1488 = vadd.f32 %v1486, %v1487
    %v1489 = vrot.slane %v1488, 1
    %v1490 = vadd.f32 %v1488, %v1489
    %v1491 = vrot.slane %v1483, 4
    %v1492 = vadd.f32 %v1483, %v1491
    %v1493 = vrot.slane %v1492, 2
    %v1494 = vadd.f32 %v1492, %v1493
    %v1495 = vrot.slane %v1494, 1
    %v1496 = vadd.f32 %v1494, %v1495
    %v1497 = vrcp.pop 8.0
    %v1498 = vmul.f32 8.0, %v1497
    %v1499 = vsub.f32 1.0, %v1498
    %v1500 = vmul.f32 %v1497, %v1499
    %v1501 = vadd.f32 %v1497, %v1500
    %vm1502 = vweird.f32 %v1497
    %v1503 = vsel %vm1502, %v1497, %v1501
    %v1504 = vmul.f32 %v1490, %v1503
    %v1505 = vmul.f32 %v1496, %v1503
    %v1506 = vsub.f32 %v1163, %v1504
    %v1507 = vsub.f32 %v1483, %v1505
    %v1508 = vmul.f32 %v1506, %v1506
    %v1509 = vmul.f32 %v1507, %v1507
    %v1510 = vrot.slane %v1508, 4
    %v1511 = vadd.f32 %v1508, %v1510
    %v1512 = vrot.slane %v1511, 2
    %v1513 = vadd.f32 %v1511, %v1512
    %v1514 = vrot.slane %v1513, 1
    %v1515 = vadd.f32 %v1513, %v1514
    %v1516 = vrot.slane %v1509, 4
    %v1517 = vadd.f32 %v1509, %v1516
    %v1518 = vrot.slane %v1517, 2
    %v1519 = vadd.f32 %v1517, %v1518
    %v1520 = vrot.slane %v1519, 1
    %v1521 = vadd.f32 %v1519, %v1520
    %v1522 = vmul.f32 %v1515, %v1503
    %v1523 = vmul.f32 %v1521, %v1503
    %v1524 = vadd.f32 %v1522, 1e-05
    %v1525 = vadd.f32 %v1523, 1e-05
    %v1526 = vrsqrt.pop %v1524
    %v1527 = vmul.f32 %v1526, %v1524
    %v1528 = vmul.f32 %v1527, %v1526
    %v1529 = vmul.f32 0.5, %v1528
    %v1530 = vsub.f32 1.5, %v1529
    %v1531 = vmul.f32 %v1526, %v1530
    %vm1532 = vweird.f32 %v1524
    %vm1533 = vweird.f32 %v1526
    %vm1534 = vmor %vm1532, %vm1533
    %v1535 = vsel %vm1534, %v1526, %v1531
    %v1536 = vrsqrt.pop %v1525
    %v1537 = vmul.f32 %v1536, %v1525
    %v1538 = vmul.f32 %v1537, %v1536
    %v1539 = vmul.f32 0.5, %v1538
    %v1540 = vsub.f32 1.5, %v1539
    %v1541 = vmul.f32 %v1536, %v1540
    %vm1542 = vweird.f32 %v1525
    %vm1543 = vweird.f32 %v1536
    %vm1544 = vmor %vm1542, %vm1543
    %v1545 = vsel %vm1544, %v1536, %v1541
    %v1546 = vmul.f32 %v1506, %v1535
    %v1547 = vmul.f32 %v1507, %v1545
    %v1548 = vld [vmem:[#allocation7] sm:$0x3]
    %v1550 = vperm.slane %v1548, 0
    %v1551 = vperm.slane %v1548, 1
    %v1554 = vmul.f32 %v1546, %v1550
    %v1555 = vmul.f32 %v1547, %v1551
    %v1556 = vld [vmem:[%s3] sm:$0x3]
    %v1558 = vperm.slane %v1556, 0
    %v1559 = vperm.slane %v1556, 1
    %v1562 = vadd.f32 %v1554, %v1558
    %v1563 = vadd.f32 %v1555, %v1559
    %v1564 = vmax.f32 %v1562, 0.0
    %v1565 = vmax.f32 %v1563, 0.0
    %1566 = vst [vmem:[#allocation8] sm:$0xff] %v1564
    %1567 = vst [vmem:[#allocation8 + $0x8] sm:$0xff] %v1565
    // Predicated region
    $region30: #{tpu_custom_call.1} parent=1 // pred_check
      _
    $region31: #{tpu_custom_call.1} parent=1 // pred_check_branch
      %1569 = sbr.rel (0) target = $region33
    $region32: #{tpu_custom_call.1} parent=1 // pred_region
      %1571 = vsyncadd [#allocation4], 0
      %s1573 = sshll.u32 [#allocation8], 4
      %s1574 = int_to_ptr.vmem [resolvable:$true] %s1573
      %s1575 = sshll.u32 %s4, 4
      %s1576 = int_to_ptr.hbm [resolvable:$true] %s1575
      %1578 = dma.vmem_to_hbm [thread:$0]  %s1574, 256, %s1576, [#allocation4]
    $region33: #{tpu_custom_call.1} parent=1 // pred_fallthru
      _
    // Predicated region
    $region34: #{tpu_custom_call.1} parent=1 // pred_check
      _
    $region35: #{tpu_custom_call.1} parent=1 // pred_check_branch
      %1580 = sbr.rel (0) target = $region37
    $region36: #{tpu_custom_call.1} parent=1 // pred_region
      %1582 = dma.done [#allocation4], 256
    $region37: #{tpu_custom_call.1} parent=1 // pred_fallthru
      _
    %1583 = vsyncpa [#allocation3], 1
    %1584 = vsyncpa [#allocation6], 1
    %1585 = vsyncpa [#allocation4], 1

</llo_original>
